<compile_context>
chip_gen: v6e
topology: v6e:2x2x1
jax: 0.10.0
libtpu: 0.0.40
codegen_flags: <defaults>
</compile_context>

<pallas_src>
import jax
import jax.numpy as jnp
import numpy as np
from jax.experimental import pallas as pl
from jax.experimental.pallas import tpu as pltpu


def _round_up(a, m):
    return (a + m - 1) // m * m


def _cnn_kernel(x_ref, w_ref, b_ref, o_ref):
    """One grid step processes TB words.

    x_ref: (TB, C*L)            bf16/f32 -- flattened (channel-major) chars
    w_ref: (L_out, C*L, F_pad)  bf16     -- conv as per-time dense matmul weights
    b_ref: (1, F_pad)           f32      -- bias, zero-padded to F_pad
    o_ref: (TB, F_pad)                   -- max-over-time features
    """
    l_out = w_ref.shape[0]
    x = x_ref[...].astype(jnp.bfloat16)        # no-op when x already arrives bf16

    # Per-time matmul with a running max: never materializes the
    # (TB, L_out*F_pad) intermediate; VPU max overlaps the next MXU matmul.
    m = jnp.dot(x, w_ref[0], preferred_element_type=jnp.float32)
    for t in range(1, l_out):
        m = jnp.maximum(
            m, jnp.dot(x, w_ref[t], preferred_element_type=jnp.float32))

    # Bias + ReLU after the time reduction (exact: both ops are monotone and
    # the bias is time-constant).  Zero-padded F lanes stay exactly zero.
    o_ref[...] = jnp.maximum(m + b_ref[...], 0.0).astype(o_ref.dtype)


def _build_matmul_weight(weight_fck, length, f_pad):
    """(F, C, K) conv weight -> (L_out, C*L, F_pad) bf16 dense matmul weights.

    W[t, c*L + l, f] = weight[f, c, l - t] if 0 <= l - t < K else 0, so
    x.reshape(B, C*L) @ W[t] is the valid Conv1d output at time t.
    """
    f, c, k = weight_fck.shape
    l_out = length - k + 1
    w_ckf = jnp.transpose(weight_fck, (1, 2, 0))            # (C, K, F)
    w = jnp.zeros((l_out, c, length, f_pad), jnp.float32)
    for t in range(l_out):
        w = w.at[t, :, t:t + k, :f].set(w_ckf)
    return w.reshape(l_out, c * length, f_pad).astype(jnp.bfloat16)


def cnn_forward(x_ncl, weight_fck, bias_f, *, batch_tile=512,
                out_dtype=None, trim_features=True):
    """x_ncl: (B, C, L) float (PyTorch NCL layout).

    Returns (B, F) in `out_dtype` (default: x's dtype).  With
    trim_features=False returns the lane-padded (B, F_pad) kernel output,
    skipping one extra HBM pass when the consumer accepts the padded layout.
    """
    b, c, length = x_ncl.shape
    f, cw, k = weight_fck.shape
    assert c == cw, "channel mismatch"
    assert length >= k, "kernel_size must not exceed max_word_length"
    l_out = length - k + 1
    cl = c * length
    f_pad = _round_up(f, 128)                  # lane-dense (>=128-wide) stores
    if out_dtype is None:
        out_dtype = x_ncl.dtype

    # Free contiguous reshape: no transpose, no extra HBM pass over x.
    x_flat = x_ncl.reshape(b, cl)

    x_bytes = jnp.dtype(x_flat.dtype).itemsize
    o_bytes = jnp.dtype(out_dtype).itemsize
    # Sublane granularity: 8 rows for 32-bit, 16 for 16-bit operands/outputs.
    min_tb = 8 * max(4 // min(x_bytes, 4), 4 // min(o_bytes, 4), 1)

    # Batch tile: no wrapper pad -- Pallas masks the ragged last block.  When
    # the batch allows it, cap TB so the grid has >= 2 steps (v7x has 2 TCs;
    # harmless on single-TC v5e/v6e).
    if b > min_tb:
        tb = _round_up(min(batch_tile, _round_up((b + 1) // 2, min_tb)), min_tb)
    else:
        tb = min_tb
    grid = (pl.cdiv(b, tb),)

    w_big = _build_matmul_weight(weight_fck, length, f_pad)  # (L_out, C*L, F_pad)
    bias_pad = jnp.zeros((1, f_pad), jnp.float32).at[0, :f].set(
        bias_f.astype(jnp.float32))

    # Explicit VMEM budget: x/out double buffers + single-buffered resident
    # weight + f32 running-max/acc tiles, with 2x headroom.  Floor 32 MiB
    # (above v5e's 16 MiB default scoped limit), cap 48 MiB (under v7x's
    # 64 MiB physical VMEM).
    est = (2 * tb * cl * x_bytes
           + l_out * cl * f_pad * 2
           + 2 * f_pad * 4
           + 2 * tb * f_pad * o_bytes
           + 2 * tb * f_pad * 4)
    vmem_limit = int(min(max(2 * est, 32 << 20), 48 << 20))

    compiler_params = pltpu.CompilerParams(
        dimension_semantics=("parallel",),
        vmem_limit_bytes=vmem_limit)

    def _call(single_buffer_resident):
        # Grid-invariant operands: constant index_map -> stay VMEM resident;
        # Buffered(1) avoids allocating a useless second pipeline buffer.
        res_kwargs = (dict(pipeline_mode=pl.Buffered(1))
                      if single_buffer_resident else {})
        return pl.pallas_call(
            _cnn_kernel,
            out_shape=jax.ShapeDtypeStruct((b, f_pad), out_dtype),
            grid_spec=pltpu.PrefetchScalarGridSpec(
                num_scalar_prefetch=0,
                grid=grid,
                in_specs=[
                    pl.BlockSpec((tb, cl), lambda i: (i, 0)),
                    pl.BlockSpec((l_out, cl, f_pad), lambda i: (0, 0, 0),
                                 **res_kwargs),
                    pl.BlockSpec((1, f_pad), lambda i: (0, 0), **res_kwargs),
                ],
                out_specs=pl.BlockSpec((tb, f_pad), lambda i: (i, 0)),
            ),
            compiler_params=compiler_params,
        )(x_flat, w_big, bias_pad)

    try:
        out = _call(True)
    except Exception:  # pragma: no cover -- JAX build without pipeline_mode
        out = _call(False)

    return out[:, :f] if trim_features else out


def _reference(x_ncl, weight_fck, bias_f):
    """Literal port of the torch module: Conv1d -> ReLU -> max over time."""
    conv = jax.lax.conv_general_dilated(
        x_ncl.astype(jnp.float32), weight_fck.astype(jnp.float32),
        window_strides=(1,), padding="VALID",
        dimension_numbers=("NCH", "OIH", "NCH"))
    conv = conv + bias_f[None, :, None]
    return jnp.max(jnp.maximum(conv, 0.0), axis=2)


if __name__ == "__main__":
    # Shapes consistent with the module's forward:
    # x: (batch_size, char_embed_dim, max_word_length)
    batch, in_channels, max_word_len = 2, 4, 16
    out_channels, kernel_size = 32, 5

    key = jax.random.PRNGKey(0)
    kx, kw, kb = jax.random.split(key, 3)

    x_f32 = jax.random.normal(kx, (batch, in_channels, max_word_len),
                              jnp.float32)
    # The char-embedding that produces x would emit bf16 upstream; feed bf16 to
    # the kernel so the x read (and the output write) is half the HBM traffic.
    x = x_f32.astype(jnp.bfloat16)

    # Deterministic param init (PyTorch Conv1d default: U(-bound, bound)).
    bound = 1.0 / np.sqrt(in_channels * kernel_size)
    weight = jax.random.uniform(kw, (out_channels, in_channels, kernel_size),
                                jnp.float32, -bound, bound)
    bias = jax.random.uniform(kb, (out_channels,), jnp.float32, -bound, bound)

    out = cnn_forward(x, weight, bias)
    out = jax.block_until_ready(out)
    assert out.shape == (batch, out_channels)
    out_f32 = np.asarray(out.astype(jnp.float32))

    # Check against a reference at the same (bf16) operand precision the MXU
    # sees (validates conv/max/bias/ReLU structure; slack for bf16 output cast).
    xq = x.astype(jnp.float32)
    wq = weight.astype(jnp.bfloat16).astype(jnp.float32)
    ref_q = np.asarray(_reference(xq, wq, bias))
    np.testing.assert_allclose(out_f32, ref_q, rtol=1e-2, atol=1e-2)

    # Sanity check against the full-f32 reference (slack for bf16 operands/out).
    ref_f32 = np.asarray(_reference(x_f32, weight, bias))
    np.testing.assert_allclose(out_f32, ref_f32, rtol=5e-2, atol=5e-2)

    print("KERNEL_OK")
</pallas_src>

<mosaic_0001>
module attributes {stable_mosaic.version = 11 : i64} {
  func.func @_cnn_kernel(%arg0: i32, %arg1: memref<16x64xbf16, #tpu.memory_space<vmem>>, %arg2: memref<12x64x128xbf16, #tpu.memory_space<vmem>>, %arg3: memref<1x128xf32, #tpu.memory_space<vmem>>, %arg4: memref<16x128xbf16, #tpu.memory_space<vmem>>) attributes {dimension_semantics = [#tpu.dimension_semantics<parallel>], iteration_bounds = array<i64: 1>, scalar_prefetch = 0 : i64, scratch_operands = 0 : i64, tpu.core_type = #tpu.core_type<tc>, window_params = [{transform_indices = @transform_0, window_bounds = array<i64: 16, 64>}, {pipeline_mode = #tpu.pipeline_mode<synchronous>, transform_indices = @transform_1, window_bounds = array<i64: 12, 64, 128>}, {pipeline_mode = #tpu.pipeline_mode<synchronous>, transform_indices = @transform_2, window_bounds = array<i64: 1, 128>}, {transform_indices = @transform_3, window_bounds = array<i64: 16, 128>}]} {
    %c0 = arith.constant 0 : index
    %c0_0 = arith.constant 0 : index
    %0 = vector.load %arg1[%c0, %c0_0] : memref<16x64xbf16, #tpu.memory_space<vmem>>, vector<16x64xbf16>
    %c0_1 = arith.constant 0 : index
    %c0_2 = arith.constant 0 : index
    %c0_3 = arith.constant 0 : index
    %1 = vector.load %arg2[%c0_1, %c0_2, %c0_3] : memref<12x64x128xbf16, #tpu.memory_space<vmem>>, vector<1x64x128xbf16>
    %2 = vector.shape_cast %1 : vector<1x64x128xbf16> to vector<64x128xbf16>
    %cst = arith.constant dense<0.000000e+00> : vector<16x128xf32>
    %3 = tpu.matmul %0, %2, %cst {dimension_numbers = #tpu.dot_dimension_numbers<[1], [0], [0], [1], [0, 0, 1, 1], [], []>} : vector<16x64xbf16>, vector<64x128xbf16>, vector<16x128xf32> -> vector<16x128xf32>
    %c1 = arith.constant 1 : index
    %c0_4 = arith.constant 0 : index
    %c0_5 = arith.constant 0 : index
    %4 = vector.load %arg2[%c1, %c0_4, %c0_5] : memref<12x64x128xbf16, #tpu.memory_space<vmem>>, vector<1x64x128xbf16>
    %5 = vector.shape_cast %4 : vector<1x64x128xbf16> to vector<64x128xbf16>
    %cst_6 = arith.constant dense<0.000000e+00> : vector<16x128xf32>
    %6 = tpu.matmul %0, %5, %cst_6 {dimension_numbers = #tpu.dot_dimension_numbers<[1], [0], [0], [1], [0, 0, 1, 1], [], []>} : vector<16x64xbf16>, vector<64x128xbf16>, vector<16x128xf32> -> vector<16x128xf32>
    %7 = arith.maximumf %3, %6 : vector<16x128xf32>
    %c2 = arith.constant 2 : index
    %c0_7 = arith.constant 0 : index
    %c0_8 = arith.constant 0 : index
    %8 = vector.load %arg2[%c2, %c0_7, %c0_8] : memref<12x64x128xbf16, #tpu.memory_space<vmem>>, vector<1x64x128xbf16>
    %9 = vector.shape_cast %8 : vector<1x64x128xbf16> to vector<64x128xbf16>
    %cst_9 = arith.constant dense<0.000000e+00> : vector<16x128xf32>
    %10 = tpu.matmul %0, %9, %cst_9 {dimension_numbers = #tpu.dot_dimension_numbers<[1], [0], [0], [1], [0, 0, 1, 1], [], []>} : vector<16x64xbf16>, vector<64x128xbf16>, vector<16x128xf32> -> vector<16x128xf32>
    %11 = arith.maximumf %7, %10 : vector<16x128xf32>
    %c3 = arith.constant 3 : index
    %c0_10 = arith.constant 0 : index
    %c0_11 = arith.constant 0 : index
    %12 = vector.load %arg2[%c3, %c0_10, %c0_11] : memref<12x64x128xbf16, #tpu.memory_space<vmem>>, vector<1x64x128xbf16>
    %13 = vector.shape_cast %12 : vector<1x64x128xbf16> to vector<64x128xbf16>
    %cst_12 = arith.constant dense<0.000000e+00> : vector<16x128xf32>
    %14 = tpu.matmul %0, %13, %cst_12 {dimension_numbers = #tpu.dot_dimension_numbers<[1], [0], [0], [1], [0, 0, 1, 1], [], []>} : vector<16x64xbf16>, vector<64x128xbf16>, vector<16x128xf32> -> vector<16x128xf32>
    %15 = arith.maximumf %11, %14 : vector<16x128xf32>
    %c4 = arith.constant 4 : index
    %c0_13 = arith.constant 0 : index
    %c0_14 = arith.constant 0 : index
    %16 = vector.load %arg2[%c4, %c0_13, %c0_14] : memref<12x64x128xbf16, #tpu.memory_space<vmem>>, vector<1x64x128xbf16>
    %17 = vector.shape_cast %16 : vector<1x64x128xbf16> to vector<64x128xbf16>
    %cst_15 = arith.constant dense<0.000000e+00> : vector<16x128xf32>
    %18 = tpu.matmul %0, %17, %cst_15 {dimension_numbers = #tpu.dot_dimension_numbers<[1], [0], [0], [1], [0, 0, 1, 1], [], []>} : vector<16x64xbf16>, vector<64x128xbf16>, vector<16x128xf32> -> vector<16x128xf32>
    %19 = arith.maximumf %15, %18 : vector<16x128xf32>
    %c5 = arith.constant 5 : index
    %c0_16 = arith.constant 0 : index
    %c0_17 = arith.constant 0 : index
    %20 = vector.load %arg2[%c5, %c0_16, %c0_17] : memref<12x64x128xbf16, #tpu.memory_space<vmem>>, vector<1x64x128xbf16>
    %21 = vector.shape_cast %20 : vector<1x64x128xbf16> to vector<64x128xbf16>
    %cst_18 = arith.constant dense<0.000000e+00> : vector<16x128xf32>
    %22 = tpu.matmul %0, %21, %cst_18 {dimension_numbers = #tpu.dot_dimension_numbers<[1], [0], [0], [1], [0, 0, 1, 1], [], []>} : vector<16x64xbf16>, vector<64x128xbf16>, vector<16x128xf32> -> vector<16x128xf32>
    %23 = arith.maximumf %19, %22 : vector<16x128xf32>
    %c6 = arith.constant 6 : index
    %c0_19 = arith.constant 0 : index
    %c0_20 = arith.constant 0 : index
    %24 = vector.load %arg2[%c6, %c0_19, %c0_20] : memref<12x64x128xbf16, #tpu.memory_space<vmem>>, vector<1x64x128xbf16>
    %25 = vector.shape_cast %24 : vector<1x64x128xbf16> to vector<64x128xbf16>
    %cst_21 = arith.constant dense<0.000000e+00> : vector<16x128xf32>
    %26 = tpu.matmul %0, %25, %cst_21 {dimension_numbers = #tpu.dot_dimension_numbers<[1], [0], [0], [1], [0, 0, 1, 1], [], []>} : vector<16x64xbf16>, vector<64x128xbf16>, vector<16x128xf32> -> vector<16x128xf32>
    %27 = arith.maximumf %23, %26 : vector<16x128xf32>
    %c7 = arith.constant 7 : index
    %c0_22 = arith.constant 0 : index
    %c0_23 = arith.constant 0 : index
    %28 = vector.load %arg2[%c7, %c0_22, %c0_23] : memref<12x64x128xbf16, #tpu.memory_space<vmem>>, vector<1x64x128xbf16>
    %29 = vector.shape_cast %28 : vector<1x64x128xbf16> to vector<64x128xbf16>
    %cst_24 = arith.constant dense<0.000000e+00> : vector<16x128xf32>
    %30 = tpu.matmul %0, %29, %cst_24 {dimension_numbers = #tpu.dot_dimension_numbers<[1], [0], [0], [1], [0, 0, 1, 1], [], []>} : vector<16x64xbf16>, vector<64x128xbf16>, vector<16x128xf32> -> vector<16x128xf32>
    %31 = arith.maximumf %27, %30 : vector<16x128xf32>
    %c8 = arith.constant 8 : index
    %c0_25 = arith.constant 0 : index
    %c0_26 = arith.constant 0 : index
    %32 = vector.load %arg2[%c8, %c0_25, %c0_26] : memref<12x64x128xbf16, #tpu.memory_space<vmem>>, vector<1x64x128xbf16>
    %33 = vector.shape_cast %32 : vector<1x64x128xbf16> to vector<64x128xbf16>
    %cst_27 = arith.constant dense<0.000000e+00> : vector<16x128xf32>
    %34 = tpu.matmul %0, %33, %cst_27 {dimension_numbers = #tpu.dot_dimension_numbers<[1], [0], [0], [1], [0, 0, 1, 1], [], []>} : vector<16x64xbf16>, vector<64x128xbf16>, vector<16x128xf32> -> vector<16x128xf32>
    %35 = arith.maximumf %31, %34 : vector<16x128xf32>
    %c9 = arith.constant 9 : index
    %c0_28 = arith.constant 0 : index
    %c0_29 = arith.constant 0 : index
    %36 = vector.load %arg2[%c9, %c0_28, %c0_29] : memref<12x64x128xbf16, #tpu.memory_space<vmem>>, vector<1x64x128xbf16>
    %37 = vector.shape_cast %36 : vector<1x64x128xbf16> to vector<64x128xbf16>
    %cst_30 = arith.constant dense<0.000000e+00> : vector<16x128xf32>
    %38 = tpu.matmul %0, %37, %cst_30 {dimension_numbers = #tpu.dot_dimension_numbers<[1], [0], [0], [1], [0, 0, 1, 1], [], []>} : vector<16x64xbf16>, vector<64x128xbf16>, vector<16x128xf32> -> vector<16x128xf32>
    %39 = arith.maximumf %35, %38 : vector<16x128xf32>
    %c10 = arith.constant 10 : index
    %c0_31 = arith.constant 0 : index
    %c0_32 = arith.constant 0 : index
    %40 = vector.load %arg2[%c10, %c0_31, %c0_32] : memref<12x64x128xbf16, #tpu.memory_space<vmem>>, vector<1x64x128xbf16>
    %41 = vector.shape_cast %40 : vector<1x64x128xbf16> to vector<64x128xbf16>
    %cst_33 = arith.constant dense<0.000000e+00> : vector<16x128xf32>
    %42 = tpu.matmul %0, %41, %cst_33 {dimension_numbers = #tpu.dot_dimension_numbers<[1], [0], [0], [1], [0, 0, 1, 1], [], []>} : vector<16x64xbf16>, vector<64x128xbf16>, vector<16x128xf32> -> vector<16x128xf32>
    %43 = arith.maximumf %39, %42 : vector<16x128xf32>
    %c11 = arith.constant 11 : index
    %c0_34 = arith.constant 0 : index
    %c0_35 = arith.constant 0 : index
    %44 = vector.load %arg2[%c11, %c0_34, %c0_35] : memref<12x64x128xbf16, #tpu.memory_space<vmem>>, vector<1x64x128xbf16>
    %45 = vector.shape_cast %44 : vector<1x64x128xbf16> to vector<64x128xbf16>
    %cst_36 = arith.constant dense<0.000000e+00> : vector<16x128xf32>
    %46 = tpu.matmul %0, %45, %cst_36 {dimension_numbers = #tpu.dot_dimension_numbers<[1], [0], [0], [1], [0, 0, 1, 1], [], []>} : vector<16x64xbf16>, vector<64x128xbf16>, vector<16x128xf32> -> vector<16x128xf32>
    %47 = arith.maximumf %43, %46 : vector<16x128xf32>
    %c0_37 = arith.constant 0 : index
    %c0_38 = arith.constant 0 : index
    %48 = vector.load %arg3[%c0_37, %c0_38] : memref<1x128xf32, #tpu.memory_space<vmem>>, vector<1x128xf32>
    %49 = vector.broadcast %48 : vector<1x128xf32> to vector<16x128xf32>
    %50 = arith.addf %47, %49 : vector<16x128xf32>
    %cst_39 = arith.constant 0.000000e+00 : f32
    %51 = vector.broadcast %cst_39 : f32 to vector<16x128xf32>
    %52 = arith.maximumf %50, %51 : vector<16x128xf32>
    %53 = arith.truncf %52 : vector<16x128xf32> to vector<16x128xbf16>
    %c0_40 = arith.constant 0 : index
    %c0_41 = arith.constant 0 : index
    %54 = vector.load %arg4[%c0_40, %c0_41] : memref<16x128xbf16, #tpu.memory_space<vmem>>, vector<16x128xbf16>
    tpu.vector_store %arg4[%c0_40, %c0_41], %53 {strides = array<i32>} : memref<16x128xbf16, #tpu.memory_space<vmem>>, vector<16x128xbf16>,
    return
  }
  func.func @transform_0(%arg0: i32) -> (i32, i32) {
    %c0_i32 = arith.constant 0 : i32
    %c0_i32_0 = arith.constant 0 : i32
    return %arg0, %c0_i32 : i32, i32
  }
  func.func @transform_1(%arg0: i32) -> (i32, i32, i32) {
    %c0_i32 = arith.constant 0 : i32
    %c0_i32_0 = arith.constant 0 : i32
    %c0_i32_1 = arith.constant 0 : i32
    %c0_i32_2 = arith.constant 0 : i32
    return %c0_i32, %c0_i32_0, %c0_i32_1 : i32, i32, i32
  }
  func.func @transform_2(%arg0: i32) -> (i32, i32) {
    %c0_i32 = arith.constant 0 : i32
    %c0_i32_0 = arith.constant 0 : i32
    %c0_i32_1 = arith.constant 0 : i32
    return %c0_i32, %c0_i32_0 : i32, i32
  }
  func.func @transform_3(%arg0: i32) -> (i32, i32) {
    %c0_i32 = arith.constant 0 : i32
    %c0_i32_0 = arith.constant 0 : i32
    return %arg0, %c0_i32 : i32, i32
  }
}

module attributes {stable_mosaic.version = 11 : i64} {
  func.func @_cnn_kernel(%arg0: i32, %arg1: memref<16x64xbf16, #tpu.memory_space<vmem>>, %arg2: memref<12x64x128xbf16, #tpu.memory_space<vmem>>, %arg3: memref<1x128xf32, #tpu.memory_space<vmem>>, %arg4: memref<16x128xbf16, #tpu.memory_space<vmem>>) attributes {dimension_semantics = [#tpu.dimension_semantics<parallel>], iteration_bounds = array<i64: 1>, scalar_prefetch = 0 : i64, scratch_operands = 0 : i64, tpu.core_type = #tpu.core_type<tc>, window_params = [{transform_indices = @transform_0, window_bounds = array<i64: 16, 64>}, {pipeline_mode = #tpu.pipeline_mode<synchronous>, transform_indices = @transform_1, window_bounds = array<i64: 12, 64, 128>}, {pipeline_mode = #tpu.pipeline_mode<synchronous>, transform_indices = @transform_2, window_bounds = array<i64: 1, 128>}, {transform_indices = @transform_3, window_bounds = array<i64: 16, 128>}]} {
    %c0 = arith.constant 0 : index
    %c0_0 = arith.constant 0 : index
    %0 = vector.load %arg1[%c0, %c0_0] : memref<16x64xbf16, #tpu.memory_space<vmem>>, vector<16x64xbf16>
    %c0_1 = arith.constant 0 : index
    %c0_2 = arith.constant 0 : index
    %c0_3 = arith.constant 0 : index
    %1 = vector.load %arg2[%c0_1, %c0_2, %c0_3] : memref<12x64x128xbf16, #tpu.memory_space<vmem>>, vector<1x64x128xbf16>
    %2 = vector.shape_cast %1 : vector<1x64x128xbf16> to vector<64x128xbf16>
    %cst = arith.constant dense<0.000000e+00> : vector<16x128xf32>
    %3 = tpu.matmul %0, %2, %cst {dimension_numbers = #tpu.dot_dimension_numbers<[1], [0], [0], [1], [0, 0, 1, 1], [], []>} : vector<16x64xbf16>, vector<64x128xbf16>, vector<16x128xf32> -> vector<16x128xf32>
    %c1 = arith.constant 1 : index
    %c0_4 = arith.constant 0 : index
    %c0_5 = arith.constant 0 : index
    %4 = vector.load %arg2[%c1, %c0_4, %c0_5] : memref<12x64x128xbf16, #tpu.memory_space<vmem>>, vector<1x64x128xbf16>
    %5 = vector.shape_cast %4 : vector<1x64x128xbf16> to vector<64x128xbf16>
    %cst_6 = arith.constant dense<0.000000e+00> : vector<16x128xf32>
    %6 = tpu.matmul %0, %5, %cst_6 {dimension_numbers = #tpu.dot_dimension_numbers<[1], [0], [0], [1], [0, 0, 1, 1], [], []>} : vector<16x64xbf16>, vector<64x128xbf16>, vector<16x128xf32> -> vector<16x128xf32>
    %7 = arith.maximumf %3, %6 : vector<16x128xf32>
    %c2 = arith.constant 2 : index
    %c0_7 = arith.constant 0 : index
    %c0_8 = arith.constant 0 : index
    %8 = vector.load %arg2[%c2, %c0_7, %c0_8] : memref<12x64x128xbf16, #tpu.memory_space<vmem>>, vector<1x64x128xbf16>
    %9 = vector.shape_cast %8 : vector<1x64x128xbf16> to vector<64x128xbf16>
    %cst_9 = arith.constant dense<0.000000e+00> : vector<16x128xf32>
    %10 = tpu.matmul %0, %9, %cst_9 {dimension_numbers = #tpu.dot_dimension_numbers<[1], [0], [0], [1], [0, 0, 1, 1], [], []>} : vector<16x64xbf16>, vector<64x128xbf16>, vector<16x128xf32> -> vector<16x128xf32>
    %11 = arith.maximumf %7, %10 : vector<16x128xf32>
    %c3 = arith.constant 3 : index
    %c0_10 = arith.constant 0 : index
    %c0_11 = arith.constant 0 : index
    %12 = vector.load %arg2[%c3, %c0_10, %c0_11] : memref<12x64x128xbf16, #tpu.memory_space<vmem>>, vector<1x64x128xbf16>
    %13 = vector.shape_cast %12 : vector<1x64x128xbf16> to vector<64x128xbf16>
    %cst_12 = arith.constant dense<0.000000e+00> : vector<16x128xf32>
    %14 = tpu.matmul %0, %13, %cst_12 {dimension_numbers = #tpu.dot_dimension_numbers<[1], [0], [0], [1], [0, 0, 1, 1], [], []>} : vector<16x64xbf16>, vector<64x128xbf16>, vector<16x128xf32> -> vector<16x128xf32>
    %15 = arith.maximumf %11, %14 : vector<16x128xf32>
    %c4 = arith.constant 4 : index
    %c0_13 = arith.constant 0 : index
    %c0_14 = arith.constant 0 : index
    %16 = vector.load %arg2[%c4, %c0_13, %c0_14] : memref<12x64x128xbf16, #tpu.memory_space<vmem>>, vector<1x64x128xbf16>
    %17 = vector.shape_cast %16 : vector<1x64x128xbf16> to vector<64x128xbf16>
    %cst_15 = arith.constant dense<0.000000e+00> : vector<16x128xf32>
    %18 = tpu.matmul %0, %17, %cst_15 {dimension_numbers = #tpu.dot_dimension_numbers<[1], [0], [0], [1], [0, 0, 1, 1], [], []>} : vector<16x64xbf16>, vector<64x128xbf16>, vector<16x128xf32> -> vector<16x128xf32>
    %19 = arith.maximumf %15, %18 : vector<16x128xf32>
    %c5 = arith.constant 5 : index
    %c0_16 = arith.constant 0 : index
    %c0_17 = arith.constant 0 : index
    %20 = vector.load %arg2[%c5, %c0_16, %c0_17] : memref<12x64x128xbf16, #tpu.memory_space<vmem>>, vector<1x64x128xbf16>
    %21 = vector.shape_cast %20 : vector<1x64x128xbf16> to vector<64x128xbf16>
    %cst_18 = arith.constant dense<0.000000e+00> : vector<16x128xf32>
    %22 = tpu.matmul %0, %21, %cst_18 {dimension_numbers = #tpu.dot_dimension_numbers<[1], [0], [0], [1], [0, 0, 1, 1], [], []>} : vector<16x64xbf16>, vector<64x128xbf16>, vector<16x128xf32> -> vector<16x128xf32>
    %23 = arith.maximumf %19, %22 : vector<16x128xf32>
    %c6 = arith.constant 6 : index
    %c0_19 = arith.constant 0 : index
    %c0_20 = arith.constant 0 : index
    %24 = vector.load %arg2[%c6, %c0_19, %c0_20] : memref<12x64x128xbf16, #tpu.memory_space<vmem>>, vector<1x64x128xbf16>
    %25 = vector.shape_cast %24 : vector<1x64x128xbf16> to vector<64x128xbf16>
    %cst_21 = arith.constant dense<0.000000e+00> : vector<16x128xf32>
    %26 = tpu.matmul %0, %25, %cst_21 {dimension_numbers = #tpu.dot_dimension_numbers<[1], [0], [0], [1], [0, 0, 1, 1], [], []>} : vector<16x64xbf16>, vector<64x128xbf16>, vector<16x128xf32> -> vector<16x128xf32>
    %27 = arith.maximumf %23, %26 : vector<16x128xf32>
    %c7 = arith.constant 7 : index
    %c0_22 = arith.constant 0 : index
    %c0_23 = arith.constant 0 : index
    %28 = vector.load %arg2[%c7, %c0_22, %c0_23] : memref<12x64x128xbf16, #tpu.memory_space<vmem>>, vector<1x64x128xbf16>
    %29 = vector.shape_cast %28 : vector<1x64x128xbf16> to vector<64x128xbf16>
    %cst_24 = arith.constant dense<0.000000e+00> : vector<16x128xf32>
    %30 = tpu.matmul %0, %29, %cst_24 {dimension_numbers = #tpu.dot_dimension_numbers<[1], [0], [0], [1], [0, 0, 1, 1], [], []>} : vector<16x64xbf16>, vector<64x128xbf16>, vector<16x128xf32> -> vector<16x128xf32>
    %31 = arith.maximumf %27, %30 : vector<16x128xf32>
    %c8 = arith.constant 8 : index
    %c0_25 = arith.constant 0 : index
    %c0_26 = arith.constant 0 : index
    %32 = vector.load %arg2[%c8, %c0_25, %c0_26] : memref<12x64x128xbf16, #tpu.memory_space<vmem>>, vector<1x64x128xbf16>
    %33 = vector.shape_cast %32 : vector<1x64x128xbf16> to vector<64x128xbf16>
    %cst_27 = arith.constant dense<0.000000e+00> : vector<16x128xf32>
    %34 = tpu.matmul %0, %33, %cst_27 {dimension_numbers = #tpu.dot_dimension_numbers<[1], [0], [0], [1], [0, 0, 1, 1], [], []>} : vector<16x64xbf16>, vector<64x128xbf16>, vector<16x128xf32> -> vector<16x128xf32>
    %35 = arith.maximumf %31, %34 : vector<16x128xf32>
    %c9 = arith.constant 9 : index
    %c0_28 = arith.constant 0 : index
    %c0_29 = arith.constant 0 : index
    %36 = vector.load %arg2[%c9, %c0_28, %c0_29] : memref<12x64x128xbf16, #tpu.memory_space<vmem>>, vector<1x64x128xbf16>
    %37 = vector.shape_cast %36 : vector<1x64x128xbf16> to vector<64x128xbf16>
    %cst_30 = arith.constant dense<0.000000e+00> : vector<16x128xf32>
    %38 = tpu.matmul %0, %37, %cst_30 {dimension_numbers = #tpu.dot_dimension_numbers<[1], [0], [0], [1], [0, 0, 1, 1], [], []>} : vector<16x64xbf16>, vector<64x128xbf16>, vector<16x128xf32> -> vector<16x128xf32>
    %39 = arith.maximumf %35, %38 : vector<16x128xf32>
    %c10 = arith.constant 10 : index
    %c0_31 = arith.constant 0 : index
    %c0_32 = arith.constant 0 : index
    %40 = vector.load %arg2[%c10, %c0_31, %c0_32] : memref<12x64x128xbf16, #tpu.memory_space<vmem>>, vector<1x64x128xbf16>
    %41 = vector.shape_cast %40 : vector<1x64x128xbf16> to vector<64x128xbf16>
    %cst_33 = arith.constant dense<0.000000e+00> : vector<16x128xf32>
    %42 = tpu.matmul %0, %41, %cst_33 {dimension_numbers = #tpu.dot_dimension_numbers<[1], [0], [0], [1], [0, 0, 1, 1], [], []>} : vector<16x64xbf16>, vector<64x128xbf16>, vector<16x128xf32> -> vector<16x128xf32>
    %43 = arith.maximumf %39, %42 : vector<16x128xf32>
    %c11 = arith.constant 11 : index
    %c0_34 = arith.constant 0 : index
    %c0_35 = arith.constant 0 : index
    %44 = vector.load %arg2[%c11, %c0_34, %c0_35] : memref<12x64x128xbf16, #tpu.memory_space<vmem>>, vector<1x64x128xbf16>
    %45 = vector.shape_cast %44 : vector<1x64x128xbf16> to vector<64x128xbf16>
    %cst_36 = arith.constant dense<0.000000e+00> : vector<16x128xf32>
    %46 = tpu.matmul %0, %45, %cst_36 {dimension_numbers = #tpu.dot_dimension_numbers<[1], [0], [0], [1], [0, 0, 1, 1], [], []>} : vector<16x64xbf16>, vector<64x128xbf16>, vector<16x128xf32> -> vector<16x128xf32>
    %47 = arith.maximumf %43, %46 : vector<16x128xf32>
    %c0_37 = arith.constant 0 : index
    %c0_38 = arith.constant 0 : index
    %48 = vector.load %arg3[%c0_37, %c0_38] : memref<1x128xf32, #tpu.memory_space<vmem>>, vector<1x128xf32>
    %49 = vector.broadcast %48 : vector<1x128xf32> to vector<16x128xf32>
    %50 = arith.addf %47, %49 : vector<16x128xf32>
    %cst_39 = arith.constant 0.000000e+00 : f32
    %51 = vector.broadcast %cst_39 : f32 to vector<16x128xf32>
    %52 = arith.maximumf %50, %51 : vector<16x128xf32>
    %53 = arith.truncf %52 : vector<16x128xf32> to vector<16x128xbf16>
    %c0_40 = arith.constant 0 : index
    %c0_41 = arith.constant 0 : index
    %54 = vector.load %arg4[%c0_40, %c0_41] : memref<16x128xbf16, #tpu.memory_space<vmem>>, vector<16x128xbf16>
    tpu.vector_store %arg4[%c0_40, %c0_41], %53 {strides = array<i32>} : memref<16x128xbf16, #tpu.memory_space<vmem>>, vector<16x128xbf16>,
    return
  }
  func.func @transform_0(%arg0: i32) -> (i32, i32) {
    %c0_i32 = arith.constant 0 : i32
    %c0_i32_0 = arith.constant 0 : i32
    return %arg0, %c0_i32 : i32, i32
  }
  func.func @transform_1(%arg0: i32) -> (i32, i32, i32) {
    %c0_i32 = arith.constant 0 : i32
    %c0_i32_0 = arith.constant 0 : i32
    %c0_i32_1 = arith.constant 0 : i32
    %c0_i32_2 = arith.constant 0 : i32
    return %c0_i32, %c0_i32_0, %c0_i32_1 : i32, i32, i32
  }
  func.func @transform_2(%arg0: i32) -> (i32, i32) {
    %c0_i32 = arith.constant 0 : i32
    %c0_i32_0 = arith.constant 0 : i32
    %c0_i32_1 = arith.constant 0 : i32
    return %c0_i32, %c0_i32_0 : i32, i32
  }
  func.func @transform_3(%arg0: i32) -> (i32, i32) {
    %c0_i32 = arith.constant 0 : i32
    %c0_i32_0 = arith.constant 0 : i32
    return %arg0, %c0_i32 : i32, i32
  }
}

</mosaic_0001>

<llo_original>
// kernel: tpu_custom_call.1
$region0: #{tpu_custom_call.1}
  #allocation0 [shape = 'u32[]', space=smem, size = 0x4, offset = 0x4, fixed_abs, tag = 'smem constant byte address 0x4 - core index']
  #allocation1 [shape = 'u32[144,128]{1,0:T(1,128)}', space=vmem, size = 0x12000, scoped, tag = 'internal scratch']
  %s0 = inlined_call_operand.hbm [shape: bf16[2,64], index: 0, kind: input, shape index: {}]
  %s1 = inlined_call_operand.hbm [shape: bf16[12,64,128], index: 1, kind: input, shape index: {}]
  %s2 = inlined_call_operand.vmem [shape: f32[1,128], index: 2, kind: input, shape index: {}]
  %s3 = inlined_call_operand.hbm [shape: bf16[2,128], index: 3, kind: output, shape index: {}]
  %s4 = sld [smem:[#allocation0]]
  $region30: #{tpu_custom_call.1} parent=0
    _
  %s6 = ssub.s32 1, %s4
  %s7 = scalar_select 0, %s6, %s4
  $region1: #{tpu_custom_call.1} parent=0
    #allocation2 [shape = 'u8[4096]{0}', space=vmem, size = 0x1000, scoped, tag = 'input window, operand 0, single buffered']
    #allocation3 [shape = 's32[1]{0}', space=sflag, size = 0x4, scoped, tag = 'scoped memory for tpu_custom_call.1']
    #allocation4 [shape = 's32[1]{0}', space=sflag, size = 0x4, scoped, tag = 'scoped memory for tpu_custom_call.1']
    #allocation5 [shape = 'u8[196608]{0}', space=vmem, size = 0x30000, scoped, tag = 'input window, operand 1, single buffered']
    #allocation6 [shape = 's32[1]{0}', space=sflag, size = 0x4, scoped, tag = 'scoped memory for tpu_custom_call.1']
    #allocation7 [shape = 'u8[4096]{0}', space=vmem, size = 0x1000, scoped, tag = 'output window, operand 0, single buffered']
    %8 = vsyncpa [#allocation3], 0
    %9 = vsyncpa [#allocation6], 0
    %10 = vsyncpa [#allocation4], 0
    // Predicated region
    $region2: #{tpu_custom_call.1} parent=1 // pred_check
      _
    $region3: #{tpu_custom_call.1} parent=1 // pred_check_branch
      %12 = sbr.rel (0) target = $region5
    $region4: #{tpu_custom_call.1} parent=1 // pred_region
      %s14 = ssub.s32 128, 16
      %15 = vsyncadd [#allocation3], %s14
      %s16 = sshll.u32 [#allocation2], 4
      %s17 = int_to_ptr.vmem [resolvable:$true] %s16
      %22 = dma.hbm_to_vmem [thread:$0]  %s0, 16, %s17, [#allocation3], 16, 16, 1
    $region5: #{tpu_custom_call.1} parent=1 // pred_fallthru
      _
    // Predicated region
    $region6: #{tpu_custom_call.1} parent=1 // pred_check
      _
    $region7: #{tpu_custom_call.1} parent=1 // pred_check_branch
      %24 = sbr.rel (0) target = $region9
    $region8: #{tpu_custom_call.1} parent=1 // pred_region
      %s26 = ssub.s32 6144, 6144
      %27 = vsyncadd [#allocation6], %s26
      %s28 = sshll.u32 [#allocation5], 4
      %s29 = int_to_ptr.vmem [resolvable:$true] %s28
      %34 = dma.hbm_to_vmem [thread:$0]  %s1, 6144, %s29, [#allocation6], 64, 64, 4
    $region9: #{tpu_custom_call.1} parent=1 // pred_fallthru
      _
    // Predicated region
    $region10: #{tpu_custom_call.1} parent=1 // pred_check
      _
    $region11: #{tpu_custom_call.1} parent=1 // pred_check_branch
      %36 = sbr.rel (0) target = $region13
    $region12: #{tpu_custom_call.1} parent=1 // pred_region
      _
    $region13: #{tpu_custom_call.1} parent=1 // pred_fallthru
      _
    // Predicated region
    $region14: #{tpu_custom_call.1} parent=1 // pred_check
      _
    $region15: #{tpu_custom_call.1} parent=1 // pred_check_branch
      %38 = sbr.rel (0) target = $region17
    $region16: #{tpu_custom_call.1} parent=1 // pred_region
      %39 = dma.done [#allocation3], 128
    $region17: #{tpu_custom_call.1} parent=1 // pred_fallthru
      _
    // Predicated region
    $region18: #{tpu_custom_call.1} parent=1 // pred_check
      _
    $region19: #{tpu_custom_call.1} parent=1 // pred_check_branch
      %41 = sbr.rel (0) target = $region21
    $region20: #{tpu_custom_call.1} parent=1 // pred_region
      %42 = dma.done [#allocation6], 6144
    $region21: #{tpu_custom_call.1} parent=1 // pred_fallthru
      _
    %v44 = vld [vmem:[#allocation2] sm:$0x1]
    %v45 = vld [vmem:[#allocation2 + $0x1] sm:$0x1]
    %v46 = vld [vmem:[#allocation2 + $0x2] sm:$0x1]
    %v47 = vld [vmem:[#allocation2 + $0x3] sm:$0x1]
    %v48 = vld [vmem:[#allocation2 + $0x4] sm:$0x1]
    %v49 = vld [vmem:[#allocation2 + $0x5] sm:$0x1]
    %v50 = vld [vmem:[#allocation2 + $0x6] sm:$0x1]
    %v51 = vld [vmem:[#allocation2 + $0x7] sm:$0x1]
    %v52 = vld [vmem:[#allocation5] sm:$0xf]
    %v53 = vld [vmem:[#allocation5 + $0x4] sm:$0xf]
    %v54 = vld [vmem:[#allocation5 + $0x8] sm:$0xf]
    %v55 = vld [vmem:[#allocation5 + $0xc] sm:$0xf]
    %v56 = vld [vmem:[#allocation5 + $0x10] sm:$0xf]
    %v57 = vld [vmem:[#allocation5 + $0x14] sm:$0xf]
    %v58 = vld [vmem:[#allocation5 + $0x18] sm:$0xf]
    %v59 = vld [vmem:[#allocation5 + $0x1c] sm:$0xf]
    %v68 = vcombine.low %v44, %v45
    %v69 = vcombine.low %v46, %v47
    %v70 = vcombine.low %v48, %v49
    %v71 = vcombine.low %v50, %v51
    %v73 = vunpack.c.l.s4 1966171168
    %v74 = vunpack.c.0.s8 %v73
    %v75 = vlaneseq
    %v76 = vshrl.u32 %v75, 7
    %v77 = vsub.s32 %v74, %v76
    %v78 = vrot.slane %v68, %v77
    %v80 = vunpack.c.l.s4 1966171168
    %v81 = vunpack.c.0.s8 %v80
    %v82 = vlaneseq
    %v83 = vshrl.u32 %v82, 7
    %v84 = vsub.s32 %v81, %v83
    %v85 = vrot.slane %v69, %v84
    %v87 = vunpack.c.l.s4 1966171168
    %v88 = vunpack.c.0.s8 %v87
    %v89 = vlaneseq
    %v90 = vshrl.u32 %v89, 7
    %v91 = vsub.s32 %v88, %v90
    %v92 = vrot.slane %v70, %v91
    %v94 = vunpack.c.l.s4 1966171168
    %v95 = vunpack.c.0.s8 %v94
    %v96 = vlaneseq
    %v97 = vshrl.u32 %v96, 7
    %v98 = vsub.s32 %v95, %v97
    %v99 = vrot.slane %v71, %v98
    %v100 = vcombine.low %v78, %v85
    %v101 = vcombine.low %v92, %v99
    %v103 = vunpack.c.l.s4 1966171168
    %v104 = vunpack.c.0.s8 %v103
    %v105 = vlaneseq
    %v106 = vshrl.u32 %v105, 7
    %v107 = vsub.s32 %v104, %v106
    %v108 = vrot.slane %v100, %v107
    %v110 = vunpack.c.l.s4 1966171168
    %v111 = vunpack.c.0.s8 %v110
    %v112 = vlaneseq
    %v113 = vshrl.u32 %v112, 7
    %v114 = vsub.s32 %v111, %v113
    %v115 = vrot.slane %v101, %v114
    %v116 = vcombine.low %v108, %v115
    %v125 = vunpack.c.l.b16 %v52
    %v126 = vunpack.c.l.b16 %v53
    %v127 = vunpack.c.l.b16 %v54
    %v128 = vunpack.c.l.b16 %v55
    %v129 = vunpack.c.l.b16 %v56
    %v130 = vunpack.c.l.b16 %v57
    %v131 = vunpack.c.l.b16 %v58
    %v132 = vunpack.c.l.b16 %v59
    %v133 = vpack.c.b16 %v126, %v125
    %v134 = vpack.c.b16 %v128, %v127
    %v135 = vpack.c.b16 %v130, %v129
    %v136 = vpack.c.b16 %v132, %v131
    %vm141 = vcmask 523264
    %v143 = vsel %vm141, %v116, 0
    %145 = vmatprep.subr.bf16.mxu0 0
    %146 = vmatpush1.bf16.msra.mxu0 0
    %147 = vmatprep.subr.bf16.mxu0 0
    %148 = vmatpush1.bf16.msra.mxu0 0
    %149 = vmatprep.subr.bf16.mxu0 0
    %150 = vmatpush1.bf16.msra.mxu0 0
    %151 = vmatprep.subr.bf16.mxu0 0
    %152 = vmatpush1.bf16.msra.mxu0 0
    %153 = vmatprep.subr.bf16.mxu0 0
    %154 = vmatpush1.bf16.msra.mxu0 %v136
    %155 = vmatprep.subr.bf16.mxu0 0
    %156 = vmatpush1.bf16.msra.mxu0 %v135
    %157 = vmatprep.subr.bf16.mxu0 0
    %158 = vmatpush1.bf16.msra.mxu0 %v134
    %159 = vmatprep.subr.bf16.mxu0 0
    %160 = vmatpush1.bf16.msra.mxu0 %v133
    %161 = vmatprep.subr.bf16.mxu0 0
    %162 = vmatpush2.bf16.msra.mxu0 0
    %163 = vmatprep.subr.bf16.mxu0 0
    %164 = vmatpush2.bf16.msra.mxu0 0
    %165 = vmatprep.subr.bf16.mxu0 0
    %166 = vmatpush2.bf16.msra.mxu0 0
    %167 = vmatprep.subr.bf16.mxu0 0
    %168 = vmatpush2.bf16.msra.mxu0 0
    %169 = vmatprep.subr.bf16.mxu0 0
    %170 = vmatpush2.bf16.msra.mxu0 0
    %171 = vmatprep.subr.bf16.mxu0 0
    %172 = vmatpush2.bf16.msra.mxu0 0
    %173 = vmatprep.subr.bf16.mxu0 0
    %174 = vmatpush2.bf16.msra.mxu0 0
    %175 = vmatprep.subr.bf16.mxu0 0
    %176 = vmatpush2.bf16.msra.mxu0 0
    %177 = vmatprep.mubr.bf16.mxu0 0
    %178 = vmatmul.mubr.bf16.gmra.mxu0 %v143
    %v179 = vpop.f32.mrf.mxu0
    %v180 = vadd.f32 0.0, %v179
    %v181 = vpop.f32.mrf.mxu0
    %v182 = vpop.f32.mrf.mxu0
    %v183 = vadd.f32 0.0, %v182
    %v184 = vpop.f32.mrf.mxu0
    %185 = vdwg.mxu0
    %s186 = scalar_lea.vmem [#allocation5], 32
    %v187 = vld [vmem:[%s186] sm:$0xf]
    %v188 = vld [vmem:[%s186 + $0x4] sm:$0xf]
    %v189 = vld [vmem:[%s186 + $0x8] sm:$0xf]
    %v190 = vld [vmem:[%s186 + $0xc] sm:$0xf]
    %v191 = vld [vmem:[%s186 + $0x10] sm:$0xf]
    %v192 = vld [vmem:[%s186 + $0x14] sm:$0xf]
    %v193 = vld [vmem:[%s186 + $0x18] sm:$0xf]
    %v194 = vld [vmem:[%s186 + $0x1c] sm:$0xf]
    %v203 = vunpack.c.l.b16 %v187
    %v204 = vunpack.c.l.b16 %v188
    %v205 = vunpack.c.l.b16 %v189
    %v206 = vunpack.c.l.b16 %v190
    %v207 = vunpack.c.l.b16 %v191
    %v208 = vunpack.c.l.b16 %v192
    %v209 = vunpack.c.l.b16 %v193
    %v210 = vunpack.c.l.b16 %v194
    %v211 = vpack.c.b16 %v204, %v203
    %v212 = vpack.c.b16 %v206, %v205
    %v213 = vpack.c.b16 %v208, %v207
    %v214 = vpack.c.b16 %v210, %v209
    %219 = vmatprep.subr.bf16.mxu0 0
    %220 = vmatpush1.bf16.msra.mxu0 0
    %221 = vmatprep.subr.bf16.mxu0 0
    %222 = vmatpush1.bf16.msra.mxu0 0
    %223 = vmatprep.subr.bf16.mxu0 0
    %224 = vmatpush1.bf16.msra.mxu0 0
    %225 = vmatprep.subr.bf16.mxu0 0
    %226 = vmatpush1.bf16.msra.mxu0 0
    %227 = vmatprep.subr.bf16.mxu0 0
    %228 = vmatpush1.bf16.msra.mxu0 %v214
    %229 = vmatprep.subr.bf16.mxu0 0
    %230 = vmatpush1.bf16.msra.mxu0 %v213
    %231 = vmatprep.subr.bf16.mxu0 0
    %232 = vmatpush1.bf16.msra.mxu0 %v212
    %233 = vmatprep.subr.bf16.mxu0 0
    %234 = vmatpush1.bf16.msra.mxu0 %v211
    %235 = vmatprep.subr.bf16.mxu0 0
    %236 = vmatpush2.bf16.msra.mxu0 0
    %237 = vmatprep.subr.bf16.mxu0 0
    %238 = vmatpush2.bf16.msra.mxu0 0
    %239 = vmatprep.subr.bf16.mxu0 0
    %240 = vmatpush2.bf16.msra.mxu0 0
    %241 = vmatprep.subr.bf16.mxu0 0
    %242 = vmatpush2.bf16.msra.mxu0 0
    %243 = vmatprep.subr.bf16.mxu0 0
    %244 = vmatpush2.bf16.msra.mxu0 0
    %245 = vmatprep.subr.bf16.mxu0 0
    %246 = vmatpush2.bf16.msra.mxu0 0
    %247 = vmatprep.subr.bf16.mxu0 0
    %248 = vmatpush2.bf16.msra.mxu0 0
    %249 = vmatprep.subr.bf16.mxu0 0
    %250 = vmatpush2.bf16.msra.mxu0 0
    %251 = vmatprep.mubr.bf16.mxu0 0
    %252 = vmatmul.mubr.bf16.gmra.mxu0 %v143
    %v253 = vpop.f32.mrf.mxu0
    %v254 = vadd.f32 0.0, %v253
    %v255 = vpop.f32.mrf.mxu0
    %v256 = vpop.f32.mrf.mxu0
    %v257 = vadd.f32 0.0, %v256
    %v258 = vpop.f32.mrf.mxu0
    %259 = vdwg.mxu0
    %v260 = vmax.f32 %v180, %v254
    %v261 = vmax.f32 %v183, %v257
    %s262 = scalar_lea.vmem [#allocation5], 64
    %v263 = vld [vmem:[%s262] sm:$0xf]
    %v264 = vld [vmem:[%s262 + $0x4] sm:$0xf]
    %v265 = vld [vmem:[%s262 + $0x8] sm:$0xf]
    %v266 = vld [vmem:[%s262 + $0xc] sm:$0xf]
    %v267 = vld [vmem:[%s262 + $0x10] sm:$0xf]
    %v268 = vld [vmem:[%s262 + $0x14] sm:$0xf]
    %v269 = vld [vmem:[%s262 + $0x18] sm:$0xf]
    %v270 = vld [vmem:[%s262 + $0x1c] sm:$0xf]
    %v279 = vunpack.c.l.b16 %v263
    %v280 = vunpack.c.l.b16 %v264
    %v281 = vunpack.c.l.b16 %v265
    %v282 = vunpack.c.l.b16 %v266
    %v283 = vunpack.c.l.b16 %v267
    %v284 = vunpack.c.l.b16 %v268
    %v285 = vunpack.c.l.b16 %v269
    %v286 = vunpack.c.l.b16 %v270
    %v287 = vpack.c.b16 %v280, %v279
    %v288 = vpack.c.b16 %v282, %v281
    %v289 = vpack.c.b16 %v284, %v283
    %v290 = vpack.c.b16 %v286, %v285
    %295 = vmatprep.subr.bf16.mxu0 0
    %296 = vmatpush1.bf16.msra.mxu0 0
    %297 = vmatprep.subr.bf16.mxu0 0
    %298 = vmatpush1.bf16.msra.mxu0 0
    %299 = vmatprep.subr.bf16.mxu0 0
    %300 = vmatpush1.bf16.msra.mxu0 0
    %301 = vmatprep.subr.bf16.mxu0 0
    %302 = vmatpush1.bf16.msra.mxu0 0
    %303 = vmatprep.subr.bf16.mxu0 0
    %304 = vmatpush1.bf16.msra.mxu0 %v290
    %305 = vmatprep.subr.bf16.mxu0 0
    %306 = vmatpush1.bf16.msra.mxu0 %v289
    %307 = vmatprep.subr.bf16.mxu0 0
    %308 = vmatpush1.bf16.msra.mxu0 %v288
    %309 = vmatprep.subr.bf16.mxu0 0
    %310 = vmatpush1.bf16.msra.mxu0 %v287
    %311 = vmatprep.subr.bf16.mxu0 0
    %312 = vmatpush2.bf16.msra.mxu0 0
    %313 = vmatprep.subr.bf16.mxu0 0
    %314 = vmatpush2.bf16.msra.mxu0 0
    %315 = vmatprep.subr.bf16.mxu0 0
    %316 = vmatpush2.bf16.msra.mxu0 0
    %317 = vmatprep.subr.bf16.mxu0 0
    %318 = vmatpush2.bf16.msra.mxu0 0
    %319 = vmatprep.subr.bf16.mxu0 0
    %320 = vmatpush2.bf16.msra.mxu0 0
    %321 = vmatprep.subr.bf16.mxu0 0
    %322 = vmatpush2.bf16.msra.mxu0 0
    %323 = vmatprep.subr.bf16.mxu0 0
    %324 = vmatpush2.bf16.msra.mxu0 0
    %325 = vmatprep.subr.bf16.mxu0 0
    %326 = vmatpush2.bf16.msra.mxu0 0
    %327 = vmatprep.mubr.bf16.mxu0 0
    %328 = vmatmul.mubr.bf16.gmra.mxu0 %v143
    %v329 = vpop.f32.mrf.mxu0
    %v330 = vadd.f32 0.0, %v329
    %v331 = vpop.f32.mrf.mxu0
    %v332 = vpop.f32.mrf.mxu0
    %v333 = vadd.f32 0.0, %v332
    %v334 = vpop.f32.mrf.mxu0
    %335 = vdwg.mxu0
    %v336 = vmax.f32 %v260, %v330
    %v337 = vmax.f32 %v261, %v333
    %s338 = scalar_lea.vmem [#allocation5], 96
    %v339 = vld [vmem:[%s338] sm:$0xf]
    %v340 = vld [vmem:[%s338 + $0x4] sm:$0xf]
    %v341 = vld [vmem:[%s338 + $0x8] sm:$0xf]
    %v342 = vld [vmem:[%s338 + $0xc] sm:$0xf]
    %v343 = vld [vmem:[%s338 + $0x10] sm:$0xf]
    %v344 = vld [vmem:[%s338 + $0x14] sm:$0xf]
    %v345 = vld [vmem:[%s338 + $0x18] sm:$0xf]
    %v346 = vld [vmem:[%s338 + $0x1c] sm:$0xf]
    %v355 = vunpack.c.l.b16 %v339
    %v356 = vunpack.c.l.b16 %v340
    %v357 = vunpack.c.l.b16 %v341
    %v358 = vunpack.c.l.b16 %v342
    %v359 = vunpack.c.l.b16 %v343
    %v360 = vunpack.c.l.b16 %v344
    %v361 = vunpack.c.l.b16 %v345
    %v362 = vunpack.c.l.b16 %v346
    %v363 = vpack.c.b16 %v356, %v355
    %v364 = vpack.c.b16 %v358, %v357
    %v365 = vpack.c.b16 %v360, %v359
    %v366 = vpack.c.b16 %v362, %v361
    %371 = vmatprep.subr.bf16.mxu0 0
    %372 = vmatpush1.bf16.msra.mxu0 0
    %373 = vmatprep.subr.bf16.mxu0 0
    %374 = vmatpush1.bf16.msra.mxu0 0
    %375 = vmatprep.subr.bf16.mxu0 0
    %376 = vmatpush1.bf16.msra.mxu0 0
    %377 = vmatprep.subr.bf16.mxu0 0
    %378 = vmatpush1.bf16.msra.mxu0 0
    %379 = vmatprep.subr.bf16.mxu0 0
    %380 = vmatpush1.bf16.msra.mxu0 %v366
    %381 = vmatprep.subr.bf16.mxu0 0
    %382 = vmatpush1.bf16.msra.mxu0 %v365
    %383 = vmatprep.subr.bf16.mxu0 0
    %384 = vmatpush1.bf16.msra.mxu0 %v364
    %385 = vmatprep.subr.bf16.mxu0 0
    %386 = vmatpush1.bf16.msra.mxu0 %v363
    %387 = vmatprep.subr.bf16.mxu0 0
    %388 = vmatpush2.bf16.msra.mxu0 0
    %389 = vmatprep.subr.bf16.mxu0 0
    %390 = vmatpush2.bf16.msra.mxu0 0
    %391 = vmatprep.subr.bf16.mxu0 0
    %392 = vmatpush2.bf16.msra.mxu0 0
    %393 = vmatprep.subr.bf16.mxu0 0
    %394 = vmatpush2.bf16.msra.mxu0 0
    %395 = vmatprep.subr.bf16.mxu0 0
    %396 = vmatpush2.bf16.msra.mxu0 0
    %397 = vmatprep.subr.bf16.mxu0 0
    %398 = vmatpush2.bf16.msra.mxu0 0
    %399 = vmatprep.subr.bf16.mxu0 0
    %400 = vmatpush2.bf16.msra.mxu0 0
    %401 = vmatprep.subr.bf16.mxu0 0
    %402 = vmatpush2.bf16.msra.mxu0 0
    %403 = vmatprep.mubr.bf16.mxu0 0
    %404 = vmatmul.mubr.bf16.gmra.mxu0 %v143
    %v405 = vpop.f32.mrf.mxu0
    %v406 = vadd.f32 0.0, %v405
    %v407 = vpop.f32.mrf.mxu0
    %v408 = vpop.f32.mrf.mxu0
    %v409 = vadd.f32 0.0, %v408
    %v410 = vpop.f32.mrf.mxu0
    %411 = vdwg.mxu0
    %v412 = vmax.f32 %v336, %v406
    %v413 = vmax.f32 %v337, %v409
    %s414 = scalar_lea.vmem [#allocation5], 128
    %v415 = vld [vmem:[%s414] sm:$0xf]
    %v416 = vld [vmem:[%s414 + $0x4] sm:$0xf]
    %v417 = vld [vmem:[%s414 + $0x8] sm:$0xf]
    %v418 = vld [vmem:[%s414 + $0xc] sm:$0xf]
    %v419 = vld [vmem:[%s414 + $0x10] sm:$0xf]
    %v420 = vld [vmem:[%s414 + $0x14] sm:$0xf]
    %v421 = vld [vmem:[%s414 + $0x18] sm:$0xf]
    %v422 = vld [vmem:[%s414 + $0x1c] sm:$0xf]
    %v431 = vunpack.c.l.b16 %v415
    %v432 = vunpack.c.l.b16 %v416
    %v433 = vunpack.c.l.b16 %v417
    %v434 = vunpack.c.l.b16 %v418
    %v435 = vunpack.c.l.b16 %v419
    %v436 = vunpack.c.l.b16 %v420
    %v437 = vunpack.c.l.b16 %v421
    %v438 = vunpack.c.l.b16 %v422
    %v439 = vpack.c.b16 %v432, %v431
    %v440 = vpack.c.b16 %v434, %v433
    %v441 = vpack.c.b16 %v436, %v435
    %v442 = vpack.c.b16 %v438, %v437
    %447 = vmatprep.subr.bf16.mxu0 0
    %448 = vmatpush1.bf16.msra.mxu0 0
    %449 = vmatprep.subr.bf16.mxu0 0
    %450 = vmatpush1.bf16.msra.mxu0 0
    %451 = vmatprep.subr.bf16.mxu0 0
    %452 = vmatpush1.bf16.msra.mxu0 0
    %453 = vmatprep.subr.bf16.mxu0 0
    %454 = vmatpush1.bf16.msra.mxu0 0
    %455 = vmatprep.subr.bf16.mxu0 0
    %456 = vmatpush1.bf16.msra.mxu0 %v442
    %457 = vmatprep.subr.bf16.mxu0 0
    %458 = vmatpush1.bf16.msra.mxu0 %v441
    %459 = vmatprep.subr.bf16.mxu0 0
    %460 = vmatpush1.bf16.msra.mxu0 %v440
    %461 = vmatprep.subr.bf16.mxu0 0
    %462 = vmatpush1.bf16.msra.mxu0 %v439
    %463 = vmatprep.subr.bf16.mxu0 0
    %464 = vmatpush2.bf16.msra.mxu0 0
    %465 = vmatprep.subr.bf16.mxu0 0
    %466 = vmatpush2.bf16.msra.mxu0 0
    %467 = vmatprep.subr.bf16.mxu0 0
    %468 = vmatpush2.bf16.msra.mxu0 0
    %469 = vmatprep.subr.bf16.mxu0 0
    %470 = vmatpush2.bf16.msra.mxu0 0
    %471 = vmatprep.subr.bf16.mxu0 0
    %472 = vmatpush2.bf16.msra.mxu0 0
    %473 = vmatprep.subr.bf16.mxu0 0
    %474 = vmatpush2.bf16.msra.mxu0 0
    %475 = vmatprep.subr.bf16.mxu0 0
    %476 = vmatpush2.bf16.msra.mxu0 0
    %477 = vmatprep.subr.bf16.mxu0 0
    %478 = vmatpush2.bf16.msra.mxu0 0
    %479 = vmatprep.mubr.bf16.mxu0 0
    %480 = vmatmul.mubr.bf16.gmra.mxu0 %v143
    %v481 = vpop.f32.mrf.mxu0
    %v482 = vadd.f32 0.0, %v481
    %v483 = vpop.f32.mrf.mxu0
    %v484 = vpop.f32.mrf.mxu0
    %v485 = vadd.f32 0.0, %v484
    %v486 = vpop.f32.mrf.mxu0
    %487 = vdwg.mxu0
    %v488 = vmax.f32 %v412, %v482
    %v489 = vmax.f32 %v413, %v485
    %s490 = scalar_lea.vmem [#allocation5], 160
    %v491 = vld [vmem:[%s490] sm:$0xf]
    %v492 = vld [vmem:[%s490 + $0x4] sm:$0xf]
    %v493 = vld [vmem:[%s490 + $0x8] sm:$0xf]
    %v494 = vld [vmem:[%s490 + $0xc] sm:$0xf]
    %v495 = vld [vmem:[%s490 + $0x10] sm:$0xf]
    %v496 = vld [vmem:[%s490 + $0x14] sm:$0xf]
    %v497 = vld [vmem:[%s490 + $0x18] sm:$0xf]
    %v498 = vld [vmem:[%s490 + $0x1c] sm:$0xf]
    %v507 = vunpack.c.l.b16 %v491
    %v508 = vunpack.c.l.b16 %v492
    %v509 = vunpack.c.l.b16 %v493
    %v510 = vunpack.c.l.b16 %v494
    %v511 = vunpack.c.l.b16 %v495
    %v512 = vunpack.c.l.b16 %v496
    %v513 = vunpack.c.l.b16 %v497
    %v514 = vunpack.c.l.b16 %v498
    %v515 = vpack.c.b16 %v508, %v507
    %v516 = vpack.c.b16 %v510, %v509
    %v517 = vpack.c.b16 %v512, %v511
    %v518 = vpack.c.b16 %v514, %v513
    %523 = vmatprep.subr.bf16.mxu0 0
    %524 = vmatpush1.bf16.msra.mxu0 0
    %525 = vmatprep.subr.bf16.mxu0 0
    %526 = vmatpush1.bf16.msra.mxu0 0
    %527 = vmatprep.subr.bf16.mxu0 0
    %528 = vmatpush1.bf16.msra.mxu0 0
    %529 = vmatprep.subr.bf16.mxu0 0
    %530 = vmatpush1.bf16.msra.mxu0 0
    %531 = vmatprep.subr.bf16.mxu0 0
    %532 = vmatpush1.bf16.msra.mxu0 %v518
    %533 = vmatprep.subr.bf16.mxu0 0
    %534 = vmatpush1.bf16.msra.mxu0 %v517
    %535 = vmatprep.subr.bf16.mxu0 0
    %536 = vmatpush1.bf16.msra.mxu0 %v516
    %537 = vmatprep.subr.bf16.mxu0 0
    %538 = vmatpush1.bf16.msra.mxu0 %v515
    %539 = vmatprep.subr.bf16.mxu0 0
    %540 = vmatpush2.bf16.msra.mxu0 0
    %541 = vmatprep.subr.bf16.mxu0 0
    %542 = vmatpush2.bf16.msra.mxu0 0
    %543 = vmatprep.subr.bf16.mxu0 0
    %544 = vmatpush2.bf16.msra.mxu0 0
    %545 = vmatprep.subr.bf16.mxu0 0
    %546 = vmatpush2.bf16.msra.mxu0 0
    %547 = vmatprep.subr.bf16.mxu0 0
    %548 = vmatpush2.bf16.msra.mxu0 0
    %549 = vmatprep.subr.bf16.mxu0 0
    %550 = vmatpush2.bf16.msra.mxu0 0
    %551 = vmatprep.subr.bf16.mxu0 0
    %552 = vmatpush2.bf16.msra.mxu0 0
    %553 = vmatprep.subr.bf16.mxu0 0
    %554 = vmatpush2.bf16.msra.mxu0 0
    %555 = vmatprep.mubr.bf16.mxu0 0
    %556 = vmatmul.mubr.bf16.gmra.mxu0 %v143
    %v557 = vpop.f32.mrf.mxu0
    %v558 = vadd.f32 0.0, %v557
    %v559 = vpop.f32.mrf.mxu0
    %v560 = vpop.f32.mrf.mxu0
    %v561 = vadd.f32 0.0, %v560
    %v562 = vpop.f32.mrf.mxu0
    %563 = vdwg.mxu0
    %v564 = vmax.f32 %v488, %v558
    %v565 = vmax.f32 %v489, %v561
    %s566 = scalar_lea.vmem [#allocation5], 192
    %v567 = vld [vmem:[%s566] sm:$0xf]
    %v568 = vld [vmem:[%s566 + $0x4] sm:$0xf]
    %v569 = vld [vmem:[%s566 + $0x8] sm:$0xf]
    %v570 = vld [vmem:[%s566 + $0xc] sm:$0xf]
    %v571 = vld [vmem:[%s566 + $0x10] sm:$0xf]
    %v572 = vld [vmem:[%s566 + $0x14] sm:$0xf]
    %v573 = vld [vmem:[%s566 + $0x18] sm:$0xf]
    %v574 = vld [vmem:[%s566 + $0x1c] sm:$0xf]
    %v583 = vunpack.c.l.b16 %v567
    %v584 = vunpack.c.l.b16 %v568
    %v585 = vunpack.c.l.b16 %v569
    %v586 = vunpack.c.l.b16 %v570
    %v587 = vunpack.c.l.b16 %v571
    %v588 = vunpack.c.l.b16 %v572
    %v589 = vunpack.c.l.b16 %v573
    %v590 = vunpack.c.l.b16 %v574
    %v591 = vpack.c.b16 %v584, %v583
    %v592 = vpack.c.b16 %v586, %v585
    %v593 = vpack.c.b16 %v588, %v587
    %v594 = vpack.c.b16 %v590, %v589
    %599 = vmatprep.subr.bf16.mxu0 0
    %600 = vmatpush1.bf16.msra.mxu0 0
    %601 = vmatprep.subr.bf16.mxu0 0
    %602 = vmatpush1.bf16.msra.mxu0 0
    %603 = vmatprep.subr.bf16.mxu0 0
    %604 = vmatpush1.bf16.msra.mxu0 0
    %605 = vmatprep.subr.bf16.mxu0 0
    %606 = vmatpush1.bf16.msra.mxu0 0
    %607 = vmatprep.subr.bf16.mxu0 0
    %608 = vmatpush1.bf16.msra.mxu0 %v594
    %609 = vmatprep.subr.bf16.mxu0 0
    %610 = vmatpush1.bf16.msra.mxu0 %v593
    %611 = vmatprep.subr.bf16.mxu0 0
    %612 = vmatpush1.bf16.msra.mxu0 %v592
    %613 = vmatprep.subr.bf16.mxu0 0
    %614 = vmatpush1.bf16.msra.mxu0 %v591
    %615 = vmatprep.subr.bf16.mxu0 0
    %616 = vmatpush2.bf16.msra.mxu0 0
    %617 = vmatprep.subr.bf16.mxu0 0
    %618 = vmatpush2.bf16.msra.mxu0 0
    %619 = vmatprep.subr.bf16.mxu0 0
    %620 = vmatpush2.bf16.msra.mxu0 0
    %621 = vmatprep.subr.bf16.mxu0 0
    %622 = vmatpush2.bf16.msra.mxu0 0
    %623 = vmatprep.subr.bf16.mxu0 0
    %624 = vmatpush2.bf16.msra.mxu0 0
    %625 = vmatprep.subr.bf16.mxu0 0
    %626 = vmatpush2.bf16.msra.mxu0 0
    %627 = vmatprep.subr.bf16.mxu0 0
    %628 = vmatpush2.bf16.msra.mxu0 0
    %629 = vmatprep.subr.bf16.mxu0 0
    %630 = vmatpush2.bf16.msra.mxu0 0
    %631 = vmatprep.mubr.bf16.mxu0 0
    %632 = vmatmul.mubr.bf16.gmra.mxu0 %v143
    %v633 = vpop.f32.mrf.mxu0
    %v634 = vadd.f32 0.0, %v633
    %v635 = vpop.f32.mrf.mxu0
    %v636 = vpop.f32.mrf.mxu0
    %v637 = vadd.f32 0.0, %v636
    %v638 = vpop.f32.mrf.mxu0
    %639 = vdwg.mxu0
    %v640 = vmax.f32 %v564, %v634
    %v641 = vmax.f32 %v565, %v637
    %s642 = scalar_lea.vmem [#allocation5], 224
    %v643 = vld [vmem:[%s642] sm:$0xf]
    %v644 = vld [vmem:[%s642 + $0x4] sm:$0xf]
    %v645 = vld [vmem:[%s642 + $0x8] sm:$0xf]
    %v646 = vld [vmem:[%s642 + $0xc] sm:$0xf]
    %v647 = vld [vmem:[%s642 + $0x10] sm:$0xf]
    %v648 = vld [vmem:[%s642 + $0x14] sm:$0xf]
    %v649 = vld [vmem:[%s642 + $0x18] sm:$0xf]
    %v650 = vld [vmem:[%s642 + $0x1c] sm:$0xf]
    %v659 = vunpack.c.l.b16 %v643
    %v660 = vunpack.c.l.b16 %v644
    %v661 = vunpack.c.l.b16 %v645
    %v662 = vunpack.c.l.b16 %v646
    %v663 = vunpack.c.l.b16 %v647
    %v664 = vunpack.c.l.b16 %v648
    %v665 = vunpack.c.l.b16 %v649
    %v666 = vunpack.c.l.b16 %v650
    %v667 = vpack.c.b16 %v660, %v659
    %v668 = vpack.c.b16 %v662, %v661
    %v669 = vpack.c.b16 %v664, %v663
    %v670 = vpack.c.b16 %v666, %v665
    %675 = vmatprep.subr.bf16.mxu0 0
    %676 = vmatpush1.bf16.msra.mxu0 0
    %677 = vmatprep.subr.bf16.mxu0 0
    %678 = vmatpush1.bf16.msra.mxu0 0
    %679 = vmatprep.subr.bf16.mxu0 0
    %680 = vmatpush1.bf16.msra.mxu0 0
    %681 = vmatprep.subr.bf16.mxu0 0
    %682 = vmatpush1.bf16.msra.mxu0 0
    %683 = vmatprep.subr.bf16.mxu0 0
    %684 = vmatpush1.bf16.msra.mxu0 %v670
    %685 = vmatprep.subr.bf16.mxu0 0
    %686 = vmatpush1.bf16.msra.mxu0 %v669
    %687 = vmatprep.subr.bf16.mxu0 0
    %688 = vmatpush1.bf16.msra.mxu0 %v668
    %689 = vmatprep.subr.bf16.mxu0 0
    %690 = vmatpush1.bf16.msra.mxu0 %v667
    %691 = vmatprep.subr.bf16.mxu0 0
    %692 = vmatpush2.bf16.msra.mxu0 0
    %693 = vmatprep.subr.bf16.mxu0 0
    %694 = vmatpush2.bf16.msra.mxu0 0
    %695 = vmatprep.subr.bf16.mxu0 0
    %696 = vmatpush2.bf16.msra.mxu0 0
    %697 = vmatprep.subr.bf16.mxu0 0
    %698 = vmatpush2.bf16.msra.mxu0 0
    %699 = vmatprep.subr.bf16.mxu0 0
    %700 = vmatpush2.bf16.msra.mxu0 0
    %701 = vmatprep.subr.bf16.mxu0 0
    %702 = vmatpush2.bf16.msra.mxu0 0
    %703 = vmatprep.subr.bf16.mxu0 0
    %704 = vmatpush2.bf16.msra.mxu0 0
    %705 = vmatprep.subr.bf16.mxu0 0
    %706 = vmatpush2.bf16.msra.mxu0 0
    %707 = vmatprep.mubr.bf16.mxu0 0
    %708 = vmatmul.mubr.bf16.gmra.mxu0 %v143
    %v709 = vpop.f32.mrf.mxu0
    %v710 = vadd.f32 0.0, %v709
    %v711 = vpop.f32.mrf.mxu0
    %v712 = vpop.f32.mrf.mxu0
    %v713 = vadd.f32 0.0, %v712
    %v714 = vpop.f32.mrf.mxu0
    %715 = vdwg.mxu0
    %v716 = vmax.f32 %v640, %v710
    %v717 = vmax.f32 %v641, %v713
    %s718 = scalar_lea.vmem [#allocation5], 256
    %v719 = vld [vmem:[%s718] sm:$0xf]
    %v720 = vld [vmem:[%s718 + $0x4] sm:$0xf]
    %v721 = vld [vmem:[%s718 + $0x8] sm:$0xf]
    %v722 = vld [vmem:[%s718 + $0xc] sm:$0xf]
    %v723 = vld [vmem:[%s718 + $0x10] sm:$0xf]
    %v724 = vld [vmem:[%s718 + $0x14] sm:$0xf]
    %v725 = vld [vmem:[%s718 + $0x18] sm:$0xf]
    %v726 = vld [vmem:[%s718 + $0x1c] sm:$0xf]
    %v735 = vunpack.c.l.b16 %v719
    %v736 = vunpack.c.l.b16 %v720
    %v737 = vunpack.c.l.b16 %v721
    %v738 = vunpack.c.l.b16 %v722
    %v739 = vunpack.c.l.b16 %v723
    %v740 = vunpack.c.l.b16 %v724
    %v741 = vunpack.c.l.b16 %v725
    %v742 = vunpack.c.l.b16 %v726
    %v743 = vpack.c.b16 %v736, %v735
    %v744 = vpack.c.b16 %v738, %v737
    %v745 = vpack.c.b16 %v740, %v739
    %v746 = vpack.c.b16 %v742, %v741
    %751 = vmatprep.subr.bf16.mxu0 0
    %752 = vmatpush1.bf16.msra.mxu0 0
    %753 = vmatprep.subr.bf16.mxu0 0
    %754 = vmatpush1.bf16.msra.mxu0 0
    %755 = vmatprep.subr.bf16.mxu0 0
    %756 = vmatpush1.bf16.msra.mxu0 0
    %757 = vmatprep.subr.bf16.mxu0 0
    %758 = vmatpush1.bf16.msra.mxu0 0
    %759 = vmatprep.subr.bf16.mxu0 0
    %760 = vmatpush1.bf16.msra.mxu0 %v746
    %761 = vmatprep.subr.bf16.mxu0 0
    %762 = vmatpush1.bf16.msra.mxu0 %v745
    %763 = vmatprep.subr.bf16.mxu0 0
    %764 = vmatpush1.bf16.msra.mxu0 %v744
    %765 = vmatprep.subr.bf16.mxu0 0
    %766 = vmatpush1.bf16.msra.mxu0 %v743
    %767 = vmatprep.subr.bf16.mxu0 0
    %768 = vmatpush2.bf16.msra.mxu0 0
    %769 = vmatprep.subr.bf16.mxu0 0
    %770 = vmatpush2.bf16.msra.mxu0 0
    %771 = vmatprep.subr.bf16.mxu0 0
    %772 = vmatpush2.bf16.msra.mxu0 0
    %773 = vmatprep.subr.bf16.mxu0 0
    %774 = vmatpush2.bf16.msra.mxu0 0
    %775 = vmatprep.subr.bf16.mxu0 0
    %776 = vmatpush2.bf16.msra.mxu0 0
    %777 = vmatprep.subr.bf16.mxu0 0
    %778 = vmatpush2.bf16.msra.mxu0 0
    %779 = vmatprep.subr.bf16.mxu0 0
    %780 = vmatpush2.bf16.msra.mxu0 0
    %781 = vmatprep.subr.bf16.mxu0 0
    %782 = vmatpush2.bf16.msra.mxu0 0
    %783 = vmatprep.mubr.bf16.mxu0 0
    %784 = vmatmul.mubr.bf16.gmra.mxu0 %v143
    %v785 = vpop.f32.mrf.mxu0
    %v786 = vadd.f32 0.0, %v785
    %v787 = vpop.f32.mrf.mxu0
    %v788 = vpop.f32.mrf.mxu0
    %v789 = vadd.f32 0.0, %v788
    %v790 = vpop.f32.mrf.mxu0
    %791 = vdwg.mxu0
    %v792 = vmax.f32 %v716, %v786
    %v793 = vmax.f32 %v717, %v789
    %s794 = scalar_lea.vmem [#allocation5], 288
    %v795 = vld [vmem:[%s794] sm:$0xf]
    %v796 = vld [vmem:[%s794 + $0x4] sm:$0xf]
    %v797 = vld [vmem:[%s794 + $0x8] sm:$0xf]
    %v798 = vld [vmem:[%s794 + $0xc] sm:$0xf]
    %v799 = vld [vmem:[%s794 + $0x10] sm:$0xf]
    %v800 = vld [vmem:[%s794 + $0x14] sm:$0xf]
    %v801 = vld [vmem:[%s794 + $0x18] sm:$0xf]
    %v802 = vld [vmem:[%s794 + $0x1c] sm:$0xf]
    %v811 = vunpack.c.l.b16 %v795
    %v812 = vunpack.c.l.b16 %v796
    %v813 = vunpack.c.l.b16 %v797
    %v814 = vunpack.c.l.b16 %v798
    %v815 = vunpack.c.l.b16 %v799
    %v816 = vunpack.c.l.b16 %v800
    %v817 = vunpack.c.l.b16 %v801
    %v818 = vunpack.c.l.b16 %v802
    %v819 = vpack.c.b16 %v812, %v811
    %v820 = vpack.c.b16 %v814, %v813
    %v821 = vpack.c.b16 %v816, %v815
    %v822 = vpack.c.b16 %v818, %v817
    %827 = vmatprep.subr.bf16.mxu0 0
    %828 = vmatpush1.bf16.msra.mxu0 0
    %829 = vmatprep.subr.bf16.mxu0 0
    %830 = vmatpush1.bf16.msra.mxu0 0
    %831 = vmatprep.subr.bf16.mxu0 0
    %832 = vmatpush1.bf16.msra.mxu0 0
    %833 = vmatprep.subr.bf16.mxu0 0
    %834 = vmatpush1.bf16.msra.mxu0 0
    %835 = vmatprep.subr.bf16.mxu0 0
    %836 = vmatpush1.bf16.msra.mxu0 %v822
    %837 = vmatprep.subr.bf16.mxu0 0
    %838 = vmatpush1.bf16.msra.mxu0 %v821
    %839 = vmatprep.subr.bf16.mxu0 0
    %840 = vmatpush1.bf16.msra.mxu0 %v820
    %841 = vmatprep.subr.bf16.mxu0 0
    %842 = vmatpush1.bf16.msra.mxu0 %v819
    %843 = vmatprep.subr.bf16.mxu0 0
    %844 = vmatpush2.bf16.msra.mxu0 0
    %845 = vmatprep.subr.bf16.mxu0 0
    %846 = vmatpush2.bf16.msra.mxu0 0
    %847 = vmatprep.subr.bf16.mxu0 0
    %848 = vmatpush2.bf16.msra.mxu0 0
    %849 = vmatprep.subr.bf16.mxu0 0
    %850 = vmatpush2.bf16.msra.mxu0 0
    %851 = vmatprep.subr.bf16.mxu0 0
    %852 = vmatpush2.bf16.msra.mxu0 0
    %853 = vmatprep.subr.bf16.mxu0 0
    %854 = vmatpush2.bf16.msra.mxu0 0
    %855 = vmatprep.subr.bf16.mxu0 0
    %856 = vmatpush2.bf16.msra.mxu0 0
    %857 = vmatprep.subr.bf16.mxu0 0
    %858 = vmatpush2.bf16.msra.mxu0 0
    %859 = vmatprep.mubr.bf16.mxu0 0
    %860 = vmatmul.mubr.bf16.gmra.mxu0 %v143
    %v861 = vpop.f32.mrf.mxu0
    %v862 = vadd.f32 0.0, %v861
    %v863 = vpop.f32.mrf.mxu0
    %v864 = vpop.f32.mrf.mxu0
    %v865 = vadd.f32 0.0, %v864
    %v866 = vpop.f32.mrf.mxu0
    %867 = vdwg.mxu0
    %v868 = vmax.f32 %v792, %v862
    %v869 = vmax.f32 %v793, %v865
    %s870 = scalar_lea.vmem [#allocation5], 320
    %v871 = vld [vmem:[%s870] sm:$0xf]
    %v872 = vld [vmem:[%s870 + $0x4] sm:$0xf]
    %v873 = vld [vmem:[%s870 + $0x8] sm:$0xf]
    %v874 = vld [vmem:[%s870 + $0xc] sm:$0xf]
    %v875 = vld [vmem:[%s870 + $0x10] sm:$0xf]
    %v876 = vld [vmem:[%s870 + $0x14] sm:$0xf]
    %v877 = vld [vmem:[%s870 + $0x18] sm:$0xf]
    %v878 = vld [vmem:[%s870 + $0x1c] sm:$0xf]
    %v887 = vunpack.c.l.b16 %v871
    %v888 = vunpack.c.l.b16 %v872
    %v889 = vunpack.c.l.b16 %v873
    %v890 = vunpack.c.l.b16 %v874
    %v891 = vunpack.c.l.b16 %v875
    %v892 = vunpack.c.l.b16 %v876
    %v893 = vunpack.c.l.b16 %v877
    %v894 = vunpack.c.l.b16 %v878
    %v895 = vpack.c.b16 %v888, %v887
    %v896 = vpack.c.b16 %v890, %v889
    %v897 = vpack.c.b16 %v892, %v891
    %v898 = vpack.c.b16 %v894, %v893
    %903 = vmatprep.subr.bf16.mxu0 0
    %904 = vmatpush1.bf16.msra.mxu0 0
    %905 = vmatprep.subr.bf16.mxu0 0
    %906 = vmatpush1.bf16.msra.mxu0 0
    %907 = vmatprep.subr.bf16.mxu0 0
    %908 = vmatpush1.bf16.msra.mxu0 0
    %909 = vmatprep.subr.bf16.mxu0 0
    %910 = vmatpush1.bf16.msra.mxu0 0
    %911 = vmatprep.subr.bf16.mxu0 0
    %912 = vmatpush1.bf16.msra.mxu0 %v898
    %913 = vmatprep.subr.bf16.mxu0 0
    %914 = vmatpush1.bf16.msra.mxu0 %v897
    %915 = vmatprep.subr.bf16.mxu0 0
    %916 = vmatpush1.bf16.msra.mxu0 %v896
    %917 = vmatprep.subr.bf16.mxu0 0
    %918 = vmatpush1.bf16.msra.mxu0 %v895
    %919 = vmatprep.subr.bf16.mxu0 0
    %920 = vmatpush2.bf16.msra.mxu0 0
    %921 = vmatprep.subr.bf16.mxu0 0
    %922 = vmatpush2.bf16.msra.mxu0 0
    %923 = vmatprep.subr.bf16.mxu0 0
    %924 = vmatpush2.bf16.msra.mxu0 0
    %925 = vmatprep.subr.bf16.mxu0 0
    %926 = vmatpush2.bf16.msra.mxu0 0
    %927 = vmatprep.subr.bf16.mxu0 0
    %928 = vmatpush2.bf16.msra.mxu0 0
    %929 = vmatprep.subr.bf16.mxu0 0
    %930 = vmatpush2.bf16.msra.mxu0 0
    %931 = vmatprep.subr.bf16.mxu0 0
    %932 = vmatpush2.bf16.msra.mxu0 0
    %933 = vmatprep.subr.bf16.mxu0 0
    %934 = vmatpush2.bf16.msra.mxu0 0
    %935 = vmatprep.mubr.bf16.mxu0 0
    %936 = vmatmul.mubr.bf16.gmra.mxu0 %v143
    %v937 = vpop.f32.mrf.mxu0
    %v938 = vadd.f32 0.0, %v937
    %v939 = vpop.f32.mrf.mxu0
    %v940 = vpop.f32.mrf.mxu0
    %v941 = vadd.f32 0.0, %v940
    %v942 = vpop.f32.mrf.mxu0
    %943 = vdwg.mxu0
    %v944 = vmax.f32 %v868, %v938
    %v945 = vmax.f32 %v869, %v941
    %s946 = scalar_lea.vmem [#allocation5], 352
    %v947 = vld [vmem:[%s946] sm:$0xf]
    %v948 = vld [vmem:[%s946 + $0x4] sm:$0xf]
    %v949 = vld [vmem:[%s946 + $0x8] sm:$0xf]
    %v950 = vld [vmem:[%s946 + $0xc] sm:$0xf]
    %v951 = vld [vmem:[%s946 + $0x10] sm:$0xf]
    %v952 = vld [vmem:[%s946 + $0x14] sm:$0xf]
    %v953 = vld [vmem:[%s946 + $0x18] sm:$0xf]
    %v954 = vld [vmem:[%s946 + $0x1c] sm:$0xf]
    %v963 = vunpack.c.l.b16 %v947
    %v964 = vunpack.c.l.b16 %v948
    %v965 = vunpack.c.l.b16 %v949
    %v966 = vunpack.c.l.b16 %v950
    %v967 = vunpack.c.l.b16 %v951
    %v968 = vunpack.c.l.b16 %v952
    %v969 = vunpack.c.l.b16 %v953
    %v970 = vunpack.c.l.b16 %v954
    %v971 = vpack.c.b16 %v964, %v963
    %v972 = vpack.c.b16 %v966, %v965
    %v973 = vpack.c.b16 %v968, %v967
    %v974 = vpack.c.b16 %v970, %v969
    %979 = vmatprep.subr.bf16.mxu0 0
    %980 = vmatpush1.bf16.msra.mxu0 0
    %981 = vmatprep.subr.bf16.mxu0 0
    %982 = vmatpush1.bf16.msra.mxu0 0
    %983 = vmatprep.subr.bf16.mxu0 0
    %984 = vmatpush1.bf16.msra.mxu0 0
    %985 = vmatprep.subr.bf16.mxu0 0
    %986 = vmatpush1.bf16.msra.mxu0 0
    %987 = vmatprep.subr.bf16.mxu0 0
    %988 = vmatpush1.bf16.msra.mxu0 %v974
    %989 = vmatprep.subr.bf16.mxu0 0
    %990 = vmatpush1.bf16.msra.mxu0 %v973
    %991 = vmatprep.subr.bf16.mxu0 0
    %992 = vmatpush1.bf16.msra.mxu0 %v972
    %993 = vmatprep.subr.bf16.mxu0 0
    %994 = vmatpush1.bf16.msra.mxu0 %v971
    %995 = vmatprep.subr.bf16.mxu0 0
    %996 = vmatpush2.bf16.msra.mxu0 0
    %997 = vmatprep.subr.bf16.mxu0 0
    %998 = vmatpush2.bf16.msra.mxu0 0
    %999 = vmatprep.subr.bf16.mxu0 0
    %1000 = vmatpush2.bf16.msra.mxu0 0
    %1001 = vmatprep.subr.bf16.mxu0 0
    %1002 = vmatpush2.bf16.msra.mxu0 0
    %1003 = vmatprep.subr.bf16.mxu0 0
    %1004 = vmatpush2.bf16.msra.mxu0 0
    %1005 = vmatprep.subr.bf16.mxu0 0
    %1006 = vmatpush2.bf16.msra.mxu0 0
    %1007 = vmatprep.subr.bf16.mxu0 0
    %1008 = vmatpush2.bf16.msra.mxu0 0
    %1009 = vmatprep.subr.bf16.mxu0 0
    %1010 = vmatpush2.bf16.msra.mxu0 0
    %1011 = vmatprep.mubr.bf16.mxu0 0
    %1012 = vmatmul.mubr.bf16.gmra.mxu0 %v143
    %v1013 = vpop.f32.mrf.mxu0
    %v1014 = vadd.f32 0.0, %v1013
    %v1015 = vpop.f32.mrf.mxu0
    %v1016 = vpop.f32.mrf.mxu0
    %v1017 = vadd.f32 0.0, %v1016
    %v1018 = vpop.f32.mrf.mxu0
    %1019 = vdwg.mxu0
    %v1020 = vmax.f32 %v944, %v1014
    %v1021 = vmax.f32 %v945, %v1017
    %v1022 = vld [vmem:[%s2] sm:$0x1]
    %v1024 = vlaneseq
    %v1025 = vshrl.u32 %v1024, 7
    %v1026 = vsub.s32 0, %v1025
    %v1027 = vrot.slane %v1022, %v1026
    %v1029 = vadd.f32 %v1020, %v1027
    %v1030 = vadd.f32 %v1021, %v1027
    %v1031 = vmax.f32 %v1029, 0.0
    %v1032 = vmax.f32 %v1030, 0.0
    %v1033 = vpack.c.bf16 %v1032, %v1031
    %v1035 = vcombine.high %v1033, %v1033
    %v1037 = vunpack.c.l.s4 1966171168
    %v1038 = vunpack.c.0.s8 %v1037
    %v1039 = vlaneseq
    %v1040 = vshrl.u32 %v1039, 7
    %v1041 = vsub.s32 %v1038, %v1040
    %v1042 = vrot.slane %v1033, %v1041
    %v1044 = vunpack.c.l.s4 1966171168
    %v1045 = vunpack.c.0.s8 %v1044
    %v1046 = vlaneseq
    %v1047 = vshrl.u32 %v1046, 7
    %v1048 = vsub.s32 %v1045, %v1047
    %v1049 = vrot.slane %v1035, %v1048
    %v1050 = vcombine.high %v1042, %v1042
    %v1051 = vcombine.high %v1049, %v1049
    %v1053 = vunpack.c.l.s4 1966171168
    %v1054 = vunpack.c.0.s8 %v1053
    %v1055 = vlaneseq
    %v1056 = vshrl.u32 %v1055, 7
    %v1057 = vsub.s32 %v1054, %v1056
    %v1058 = vrot.slane %v1042, %v1057
    %v1060 = vunpack.c.l.s4 1966171168
    %v1061 = vunpack.c.0.s8 %v1060
    %v1062 = vlaneseq
    %v1063 = vshrl.u32 %v1062, 7
    %v1064 = vsub.s32 %v1061, %v1063
    %v1065 = vrot.slane %v1049, %v1064
    %v1067 = vunpack.c.l.s4 1966171168
    %v1068 = vunpack.c.0.s8 %v1067
    %v1069 = vlaneseq
    %v1070 = vshrl.u32 %v1069, 7
    %v1071 = vsub.s32 %v1068, %v1070
    %v1072 = vrot.slane %v1050, %v1071
    %v1074 = vunpack.c.l.s4 1966171168
    %v1075 = vunpack.c.0.s8 %v1074
    %v1076 = vlaneseq
    %v1077 = vshrl.u32 %v1076, 7
    %v1078 = vsub.s32 %v1075, %v1077
    %v1079 = vrot.slane %v1051, %v1078
    %v1080 = vcombine.high %v1058, %v1058
    %v1081 = vcombine.high %v1065, %v1065
    %v1082 = vcombine.high %v1072, %v1072
    %v1083 = vcombine.high %v1079, %v1079
    %1092 = vst [vmem:[#allocation7] sm:$0x1] %v1058
    %1093 = vst [vmem:[#allocation7 + $0x1] sm:$0x1] %v1072
    %1094 = vst [vmem:[#allocation7 + $0x2] sm:$0x1] %v1080
    %1095 = vst [vmem:[#allocation7 + $0x3] sm:$0x1] %v1082
    %1096 = vst [vmem:[#allocation7 + $0x4] sm:$0x1] %v1065
    %1097 = vst [vmem:[#allocation7 + $0x5] sm:$0x1] %v1079
    %1098 = vst [vmem:[#allocation7 + $0x6] sm:$0x1] %v1081
    %1099 = vst [vmem:[#allocation7 + $0x7] sm:$0x1] %v1083
    // Predicated region
    $region22: #{tpu_custom_call.1} parent=1 // pred_check
      _
    $region23: #{tpu_custom_call.1} parent=1 // pred_check_branch
      %1101 = sbr.rel (0) target = $region25
    $region24: #{tpu_custom_call.1} parent=1 // pred_region
      %s1103 = ssub.s32 128, 16
      %1104 = vsyncadd [#allocation4], %s1103
      %s1105 = sshll.u32 [#allocation7], 4
      %s1106 = int_to_ptr.vmem [resolvable:$true] %s1105
      %1111 = dma.vmem_to_hbm [thread:$0]  %s1106, 16, %s3, [#allocation4], 16, 16, 1
    $region25: #{tpu_custom_call.1} parent=1 // pred_fallthru
      _
    // Predicated region
    $region26: #{tpu_custom_call.1} parent=1 // pred_check
      _
    $region27: #{tpu_custom_call.1} parent=1 // pred_check_branch
      %1113 = sbr.rel (0) target = $region29
    $region28: #{tpu_custom_call.1} parent=1 // pred_region
      %1114 = dma.done [#allocation4], 128
    $region29: #{tpu_custom_call.1} parent=1 // pred_fallthru
      _
    %1115 = vsyncpa [#allocation3], 1
    %1116 = vsyncpa [#allocation6], 1
    %1117 = vsyncpa [#allocation4], 1

// kernel: tpu_custom_call.1
$region0: #{tpu_custom_call.1}
  #allocation0 [shape = 'u32[]', space=smem, size = 0x4, offset = 0x4, fixed_abs, tag = 'smem constant byte address 0x4 - core index']
  #allocation1 [shape = 'u32[144,128]{1,0:T(1,128)}', space=vmem, size = 0x12000, scoped, tag = 'internal scratch']
  %s0 = inlined_call_operand.hbm [shape: bf16[2,64], index: 0, kind: input, shape index: {}]
  %s1 = inlined_call_operand.hbm [shape: bf16[12,64,128], index: 1, kind: input, shape index: {}]
  %s2 = inlined_call_operand.vmem [shape: f32[1,128], index: 2, kind: input, shape index: {}]
  %s3 = inlined_call_operand.hbm [shape: bf16[2,128], index: 3, kind: output, shape index: {}]
  %s4 = sld [smem:[#allocation0]]
  $region30: #{tpu_custom_call.1} parent=0
    _
  %s6 = ssub.s32 1, %s4
  %s7 = scalar_select 0, %s6, %s4
  $region1: #{tpu_custom_call.1} parent=0
    #allocation2 [shape = 'u8[4096]{0}', space=vmem, size = 0x1000, scoped, tag = 'input window, operand 0, single buffered']
    #allocation3 [shape = 's32[1]{0}', space=sflag, size = 0x4, scoped, tag = 'scoped memory for tpu_custom_call.1']
    #allocation4 [shape = 's32[1]{0}', space=sflag, size = 0x4, scoped, tag = 'scoped memory for tpu_custom_call.1']
    #allocation5 [shape = 'u8[196608]{0}', space=vmem, size = 0x30000, scoped, tag = 'input window, operand 1, single buffered']
    #allocation6 [shape = 's32[1]{0}', space=sflag, size = 0x4, scoped, tag = 'scoped memory for tpu_custom_call.1']
    #allocation7 [shape = 'u8[4096]{0}', space=vmem, size = 0x1000, scoped, tag = 'output window, operand 0, single buffered']
    %8 = vsyncpa [#allocation3], 0
    %9 = vsyncpa [#allocation6], 0
    %10 = vsyncpa [#allocation4], 0
    // Predicated region
    $region2: #{tpu_custom_call.1} parent=1 // pred_check
      _
    $region3: #{tpu_custom_call.1} parent=1 // pred_check_branch
      %12 = sbr.rel (0) target = $region5
    $region4: #{tpu_custom_call.1} parent=1 // pred_region
      %s14 = ssub.s32 128, 16
      %15 = vsyncadd [#allocation3], %s14
      %s16 = sshll.u32 [#allocation2], 4
      %s17 = int_to_ptr.vmem [resolvable:$true] %s16
      %22 = dma.hbm_to_vmem [thread:$0]  %s0, 16, %s17, [#allocation3], 16, 16, 1
    $region5: #{tpu_custom_call.1} parent=1 // pred_fallthru
      _
    // Predicated region
    $region6: #{tpu_custom_call.1} parent=1 // pred_check
      _
    $region7: #{tpu_custom_call.1} parent=1 // pred_check_branch
      %24 = sbr.rel (0) target = $region9
    $region8: #{tpu_custom_call.1} parent=1 // pred_region
      %s26 = ssub.s32 6144, 6144
      %27 = vsyncadd [#allocation6], %s26
      %s28 = sshll.u32 [#allocation5], 4
      %s29 = int_to_ptr.vmem [resolvable:$true] %s28
      %34 = dma.hbm_to_vmem [thread:$0]  %s1, 6144, %s29, [#allocation6], 64, 64, 4
    $region9: #{tpu_custom_call.1} parent=1 // pred_fallthru
      _
    // Predicated region
    $region10: #{tpu_custom_call.1} parent=1 // pred_check
      _
    $region11: #{tpu_custom_call.1} parent=1 // pred_check_branch
      %36 = sbr.rel (0) target = $region13
    $region12: #{tpu_custom_call.1} parent=1 // pred_region
      _
    $region13: #{tpu_custom_call.1} parent=1 // pred_fallthru
      _
    // Predicated region
    $region14: #{tpu_custom_call.1} parent=1 // pred_check
      _
    $region15: #{tpu_custom_call.1} parent=1 // pred_check_branch
      %38 = sbr.rel (0) target = $region17
    $region16: #{tpu_custom_call.1} parent=1 // pred_region
      %39 = dma.done [#allocation3], 128
    $region17: #{tpu_custom_call.1} parent=1 // pred_fallthru
      _
    // Predicated region
    $region18: #{tpu_custom_call.1} parent=1 // pred_check
      _
    $region19: #{tpu_custom_call.1} parent=1 // pred_check_branch
      %41 = sbr.rel (0) target = $region21
    $region20: #{tpu_custom_call.1} parent=1 // pred_region
      %42 = dma.done [#allocation6], 6144
    $region21: #{tpu_custom_call.1} parent=1 // pred_fallthru
      _
    %v44 = vld [vmem:[#allocation2] sm:$0x1]
    %v45 = vld [vmem:[#allocation2 + $0x1] sm:$0x1]
    %v46 = vld [vmem:[#allocation2 + $0x2] sm:$0x1]
    %v47 = vld [vmem:[#allocation2 + $0x3] sm:$0x1]
    %v48 = vld [vmem:[#allocation2 + $0x4] sm:$0x1]
    %v49 = vld [vmem:[#allocation2 + $0x5] sm:$0x1]
    %v50 = vld [vmem:[#allocation2 + $0x6] sm:$0x1]
    %v51 = vld [vmem:[#allocation2 + $0x7] sm:$0x1]
    %v52 = vld [vmem:[#allocation5] sm:$0xf]
    %v53 = vld [vmem:[#allocation5 + $0x4] sm:$0xf]
    %v54 = vld [vmem:[#allocation5 + $0x8] sm:$0xf]
    %v55 = vld [vmem:[#allocation5 + $0xc] sm:$0xf]
    %v56 = vld [vmem:[#allocation5 + $0x10] sm:$0xf]
    %v57 = vld [vmem:[#allocation5 + $0x14] sm:$0xf]
    %v58 = vld [vmem:[#allocation5 + $0x18] sm:$0xf]
    %v59 = vld [vmem:[#allocation5 + $0x1c] sm:$0xf]
    %v68 = vcombine.low %v44, %v45
    %v69 = vcombine.low %v46, %v47
    %v70 = vcombine.low %v48, %v49
    %v71 = vcombine.low %v50, %v51
    %v73 = vunpack.c.l.s4 1966171168
    %v74 = vunpack.c.0.s8 %v73
    %v75 = vlaneseq
    %v76 = vshrl.u32 %v75, 7
    %v77 = vsub.s32 %v74, %v76
    %v78 = vrot.slane %v68, %v77
    %v80 = vunpack.c.l.s4 1966171168
    %v81 = vunpack.c.0.s8 %v80
    %v82 = vlaneseq
    %v83 = vshrl.u32 %v82, 7
    %v84 = vsub.s32 %v81, %v83
    %v85 = vrot.slane %v69, %v84
    %v87 = vunpack.c.l.s4 1966171168
    %v88 = vunpack.c.0.s8 %v87
    %v89 = vlaneseq
    %v90 = vshrl.u32 %v89, 7
    %v91 = vsub.s32 %v88, %v90
    %v92 = vrot.slane %v70, %v91
    %v94 = vunpack.c.l.s4 1966171168
    %v95 = vunpack.c.0.s8 %v94
    %v96 = vlaneseq
    %v97 = vshrl.u32 %v96, 7
    %v98 = vsub.s32 %v95, %v97
    %v99 = vrot.slane %v71, %v98
    %v100 = vcombine.low %v78, %v85
    %v101 = vcombine.low %v92, %v99
    %v103 = vunpack.c.l.s4 1966171168
    %v104 = vunpack.c.0.s8 %v103
    %v105 = vlaneseq
    %v106 = vshrl.u32 %v105, 7
    %v107 = vsub.s32 %v104, %v106
    %v108 = vrot.slane %v100, %v107
    %v110 = vunpack.c.l.s4 1966171168
    %v111 = vunpack.c.0.s8 %v110
    %v112 = vlaneseq
    %v113 = vshrl.u32 %v112, 7
    %v114 = vsub.s32 %v111, %v113
    %v115 = vrot.slane %v101, %v114
    %v116 = vcombine.low %v108, %v115
    %v125 = vunpack.c.l.b16 %v52
    %v126 = vunpack.c.l.b16 %v53
    %v127 = vunpack.c.l.b16 %v54
    %v128 = vunpack.c.l.b16 %v55
    %v129 = vunpack.c.l.b16 %v56
    %v130 = vunpack.c.l.b16 %v57
    %v131 = vunpack.c.l.b16 %v58
    %v132 = vunpack.c.l.b16 %v59
    %v133 = vpack.c.b16 %v126, %v125
    %v134 = vpack.c.b16 %v128, %v127
    %v135 = vpack.c.b16 %v130, %v129
    %v136 = vpack.c.b16 %v132, %v131
    %vm141 = vcmask 523264
    %v143 = vsel %vm141, %v116, 0
    %145 = vmatprep.subr.bf16.mxu0 0
    %146 = vmatpush1.bf16.msra.mxu0 0
    %147 = vmatprep.subr.bf16.mxu0 0
    %148 = vmatpush1.bf16.msra.mxu0 0
    %149 = vmatprep.subr.bf16.mxu0 0
    %150 = vmatpush1.bf16.msra.mxu0 0
    %151 = vmatprep.subr.bf16.mxu0 0
    %152 = vmatpush1.bf16.msra.mxu0 0
    %153 = vmatprep.subr.bf16.mxu0 0
    %154 = vmatpush1.bf16.msra.mxu0 %v136
    %155 = vmatprep.subr.bf16.mxu0 0
    %156 = vmatpush1.bf16.msra.mxu0 %v135
    %157 = vmatprep.subr.bf16.mxu0 0
    %158 = vmatpush1.bf16.msra.mxu0 %v134
    %159 = vmatprep.subr.bf16.mxu0 0
    %160 = vmatpush1.bf16.msra.mxu0 %v133
    %161 = vmatprep.subr.bf16.mxu0 0
    %162 = vmatpush2.bf16.msra.mxu0 0
    %163 = vmatprep.subr.bf16.mxu0 0
    %164 = vmatpush2.bf16.msra.mxu0 0
    %165 = vmatprep.subr.bf16.mxu0 0
    %166 = vmatpush2.bf16.msra.mxu0 0
    %167 = vmatprep.subr.bf16.mxu0 0
    %168 = vmatpush2.bf16.msra.mxu0 0
    %169 = vmatprep.subr.bf16.mxu0 0
    %170 = vmatpush2.bf16.msra.mxu0 0
    %171 = vmatprep.subr.bf16.mxu0 0
    %172 = vmatpush2.bf16.msra.mxu0 0
    %173 = vmatprep.subr.bf16.mxu0 0
    %174 = vmatpush2.bf16.msra.mxu0 0
    %175 = vmatprep.subr.bf16.mxu0 0
    %176 = vmatpush2.bf16.msra.mxu0 0
    %177 = vmatprep.mubr.bf16.mxu0 0
    %178 = vmatmul.mubr.bf16.gmra.mxu0 %v143
    %v179 = vpop.f32.mrf.mxu0
    %v180 = vadd.f32 0.0, %v179
    %v181 = vpop.f32.mrf.mxu0
    %v182 = vpop.f32.mrf.mxu0
    %v183 = vadd.f32 0.0, %v182
    %v184 = vpop.f32.mrf.mxu0
    %185 = vdwg.mxu0
    %s186 = scalar_lea.vmem [#allocation5], 32
    %v187 = vld [vmem:[%s186] sm:$0xf]
    %v188 = vld [vmem:[%s186 + $0x4] sm:$0xf]
    %v189 = vld [vmem:[%s186 + $0x8] sm:$0xf]
    %v190 = vld [vmem:[%s186 + $0xc] sm:$0xf]
    %v191 = vld [vmem:[%s186 + $0x10] sm:$0xf]
    %v192 = vld [vmem:[%s186 + $0x14] sm:$0xf]
    %v193 = vld [vmem:[%s186 + $0x18] sm:$0xf]
    %v194 = vld [vmem:[%s186 + $0x1c] sm:$0xf]
    %v203 = vunpack.c.l.b16 %v187
    %v204 = vunpack.c.l.b16 %v188
    %v205 = vunpack.c.l.b16 %v189
    %v206 = vunpack.c.l.b16 %v190
    %v207 = vunpack.c.l.b16 %v191
    %v208 = vunpack.c.l.b16 %v192
    %v209 = vunpack.c.l.b16 %v193
    %v210 = vunpack.c.l.b16 %v194
    %v211 = vpack.c.b16 %v204, %v203
    %v212 = vpack.c.b16 %v206, %v205
    %v213 = vpack.c.b16 %v208, %v207
    %v214 = vpack.c.b16 %v210, %v209
    %219 = vmatprep.subr.bf16.mxu0 0
    %220 = vmatpush1.bf16.msra.mxu0 0
    %221 = vmatprep.subr.bf16.mxu0 0
    %222 = vmatpush1.bf16.msra.mxu0 0
    %223 = vmatprep.subr.bf16.mxu0 0
    %224 = vmatpush1.bf16.msra.mxu0 0
    %225 = vmatprep.subr.bf16.mxu0 0
    %226 = vmatpush1.bf16.msra.mxu0 0
    %227 = vmatprep.subr.bf16.mxu0 0
    %228 = vmatpush1.bf16.msra.mxu0 %v214
    %229 = vmatprep.subr.bf16.mxu0 0
    %230 = vmatpush1.bf16.msra.mxu0 %v213
    %231 = vmatprep.subr.bf16.mxu0 0
    %232 = vmatpush1.bf16.msra.mxu0 %v212
    %233 = vmatprep.subr.bf16.mxu0 0
    %234 = vmatpush1.bf16.msra.mxu0 %v211
    %235 = vmatprep.subr.bf16.mxu0 0
    %236 = vmatpush2.bf16.msra.mxu0 0
    %237 = vmatprep.subr.bf16.mxu0 0
    %238 = vmatpush2.bf16.msra.mxu0 0
    %239 = vmatprep.subr.bf16.mxu0 0
    %240 = vmatpush2.bf16.msra.mxu0 0
    %241 = vmatprep.subr.bf16.mxu0 0
    %242 = vmatpush2.bf16.msra.mxu0 0
    %243 = vmatprep.subr.bf16.mxu0 0
    %244 = vmatpush2.bf16.msra.mxu0 0
    %245 = vmatprep.subr.bf16.mxu0 0
    %246 = vmatpush2.bf16.msra.mxu0 0
    %247 = vmatprep.subr.bf16.mxu0 0
    %248 = vmatpush2.bf16.msra.mxu0 0
    %249 = vmatprep.subr.bf16.mxu0 0
    %250 = vmatpush2.bf16.msra.mxu0 0
    %251 = vmatprep.mubr.bf16.mxu0 0
    %252 = vmatmul.mubr.bf16.gmra.mxu0 %v143
    %v253 = vpop.f32.mrf.mxu0
    %v254 = vadd.f32 0.0, %v253
    %v255 = vpop.f32.mrf.mxu0
    %v256 = vpop.f32.mrf.mxu0
    %v257 = vadd.f32 0.0, %v256
    %v258 = vpop.f32.mrf.mxu0
    %259 = vdwg.mxu0
    %v260 = vmax.f32 %v180, %v254
    %v261 = vmax.f32 %v183, %v257
    %s262 = scalar_lea.vmem [#allocation5], 64
    %v263 = vld [vmem:[%s262] sm:$0xf]
    %v264 = vld [vmem:[%s262 + $0x4] sm:$0xf]
    %v265 = vld [vmem:[%s262 + $0x8] sm:$0xf]
    %v266 = vld [vmem:[%s262 + $0xc] sm:$0xf]
    %v267 = vld [vmem:[%s262 + $0x10] sm:$0xf]
    %v268 = vld [vmem:[%s262 + $0x14] sm:$0xf]
    %v269 = vld [vmem:[%s262 + $0x18] sm:$0xf]
    %v270 = vld [vmem:[%s262 + $0x1c] sm:$0xf]
    %v279 = vunpack.c.l.b16 %v263
    %v280 = vunpack.c.l.b16 %v264
    %v281 = vunpack.c.l.b16 %v265
    %v282 = vunpack.c.l.b16 %v266
    %v283 = vunpack.c.l.b16 %v267
    %v284 = vunpack.c.l.b16 %v268
    %v285 = vunpack.c.l.b16 %v269
    %v286 = vunpack.c.l.b16 %v270
    %v287 = vpack.c.b16 %v280, %v279
    %v288 = vpack.c.b16 %v282, %v281
    %v289 = vpack.c.b16 %v284, %v283
    %v290 = vpack.c.b16 %v286, %v285
    %295 = vmatprep.subr.bf16.mxu0 0
    %296 = vmatpush1.bf16.msra.mxu0 0
    %297 = vmatprep.subr.bf16.mxu0 0
    %298 = vmatpush1.bf16.msra.mxu0 0
    %299 = vmatprep.subr.bf16.mxu0 0
    %300 = vmatpush1.bf16.msra.mxu0 0
    %301 = vmatprep.subr.bf16.mxu0 0
    %302 = vmatpush1.bf16.msra.mxu0 0
    %303 = vmatprep.subr.bf16.mxu0 0
    %304 = vmatpush1.bf16.msra.mxu0 %v290
    %305 = vmatprep.subr.bf16.mxu0 0
    %306 = vmatpush1.bf16.msra.mxu0 %v289
    %307 = vmatprep.subr.bf16.mxu0 0
    %308 = vmatpush1.bf16.msra.mxu0 %v288
    %309 = vmatprep.subr.bf16.mxu0 0
    %310 = vmatpush1.bf16.msra.mxu0 %v287
    %311 = vmatprep.subr.bf16.mxu0 0
    %312 = vmatpush2.bf16.msra.mxu0 0
    %313 = vmatprep.subr.bf16.mxu0 0
    %314 = vmatpush2.bf16.msra.mxu0 0
    %315 = vmatprep.subr.bf16.mxu0 0
    %316 = vmatpush2.bf16.msra.mxu0 0
    %317 = vmatprep.subr.bf16.mxu0 0
    %318 = vmatpush2.bf16.msra.mxu0 0
    %319 = vmatprep.subr.bf16.mxu0 0
    %320 = vmatpush2.bf16.msra.mxu0 0
    %321 = vmatprep.subr.bf16.mxu0 0
    %322 = vmatpush2.bf16.msra.mxu0 0
    %323 = vmatprep.subr.bf16.mxu0 0
    %324 = vmatpush2.bf16.msra.mxu0 0
    %325 = vmatprep.subr.bf16.mxu0 0
    %326 = vmatpush2.bf16.msra.mxu0 0
    %327 = vmatprep.mubr.bf16.mxu0 0
    %328 = vmatmul.mubr.bf16.gmra.mxu0 %v143
    %v329 = vpop.f32.mrf.mxu0
    %v330 = vadd.f32 0.0, %v329
    %v331 = vpop.f32.mrf.mxu0
    %v332 = vpop.f32.mrf.mxu0
    %v333 = vadd.f32 0.0, %v332
    %v334 = vpop.f32.mrf.mxu0
    %335 = vdwg.mxu0
    %v336 = vmax.f32 %v260, %v330
    %v337 = vmax.f32 %v261, %v333
    %s338 = scalar_lea.vmem [#allocation5], 96
    %v339 = vld [vmem:[%s338] sm:$0xf]
    %v340 = vld [vmem:[%s338 + $0x4] sm:$0xf]
    %v341 = vld [vmem:[%s338 + $0x8] sm:$0xf]
    %v342 = vld [vmem:[%s338 + $0xc] sm:$0xf]
    %v343 = vld [vmem:[%s338 + $0x10] sm:$0xf]
    %v344 = vld [vmem:[%s338 + $0x14] sm:$0xf]
    %v345 = vld [vmem:[%s338 + $0x18] sm:$0xf]
    %v346 = vld [vmem:[%s338 + $0x1c] sm:$0xf]
    %v355 = vunpack.c.l.b16 %v339
    %v356 = vunpack.c.l.b16 %v340
    %v357 = vunpack.c.l.b16 %v341
    %v358 = vunpack.c.l.b16 %v342
    %v359 = vunpack.c.l.b16 %v343
    %v360 = vunpack.c.l.b16 %v344
    %v361 = vunpack.c.l.b16 %v345
    %v362 = vunpack.c.l.b16 %v346
    %v363 = vpack.c.b16 %v356, %v355
    %v364 = vpack.c.b16 %v358, %v357
    %v365 = vpack.c.b16 %v360, %v359
    %v366 = vpack.c.b16 %v362, %v361
    %371 = vmatprep.subr.bf16.mxu0 0
    %372 = vmatpush1.bf16.msra.mxu0 0
    %373 = vmatprep.subr.bf16.mxu0 0
    %374 = vmatpush1.bf16.msra.mxu0 0
    %375 = vmatprep.subr.bf16.mxu0 0
    %376 = vmatpush1.bf16.msra.mxu0 0
    %377 = vmatprep.subr.bf16.mxu0 0
    %378 = vmatpush1.bf16.msra.mxu0 0
    %379 = vmatprep.subr.bf16.mxu0 0
    %380 = vmatpush1.bf16.msra.mxu0 %v366
    %381 = vmatprep.subr.bf16.mxu0 0
    %382 = vmatpush1.bf16.msra.mxu0 %v365
    %383 = vmatprep.subr.bf16.mxu0 0
    %384 = vmatpush1.bf16.msra.mxu0 %v364
    %385 = vmatprep.subr.bf16.mxu0 0
    %386 = vmatpush1.bf16.msra.mxu0 %v363
    %387 = vmatprep.subr.bf16.mxu0 0
    %388 = vmatpush2.bf16.msra.mxu0 0
    %389 = vmatprep.subr.bf16.mxu0 0
    %390 = vmatpush2.bf16.msra.mxu0 0
    %391 = vmatprep.subr.bf16.mxu0 0
    %392 = vmatpush2.bf16.msra.mxu0 0
    %393 = vmatprep.subr.bf16.mxu0 0
    %394 = vmatpush2.bf16.msra.mxu0 0
    %395 = vmatprep.subr.bf16.mxu0 0
    %396 = vmatpush2.bf16.msra.mxu0 0
    %397 = vmatprep.subr.bf16.mxu0 0
    %398 = vmatpush2.bf16.msra.mxu0 0
    %399 = vmatprep.subr.bf16.mxu0 0
    %400 = vmatpush2.bf16.msra.mxu0 0
    %401 = vmatprep.subr.bf16.mxu0 0
    %402 = vmatpush2.bf16.msra.mxu0 0
    %403 = vmatprep.mubr.bf16.mxu0 0
    %404 = vmatmul.mubr.bf16.gmra.mxu0 %v143
    %v405 = vpop.f32.mrf.mxu0
    %v406 = vadd.f32 0.0, %v405
    %v407 = vpop.f32.mrf.mxu0
    %v408 = vpop.f32.mrf.mxu0
    %v409 = vadd.f32 0.0, %v408
    %v410 = vpop.f32.mrf.mxu0
    %411 = vdwg.mxu0
    %v412 = vmax.f32 %v336, %v406
    %v413 = vmax.f32 %v337, %v409
    %s414 = scalar_lea.vmem [#allocation5], 128
    %v415 = vld [vmem:[%s414] sm:$0xf]
    %v416 = vld [vmem:[%s414 + $0x4] sm:$0xf]
    %v417 = vld [vmem:[%s414 + $0x8] sm:$0xf]
    %v418 = vld [vmem:[%s414 + $0xc] sm:$0xf]
    %v419 = vld [vmem:[%s414 + $0x10] sm:$0xf]
    %v420 = vld [vmem:[%s414 + $0x14] sm:$0xf]
    %v421 = vld [vmem:[%s414 + $0x18] sm:$0xf]
    %v422 = vld [vmem:[%s414 + $0x1c] sm:$0xf]
    %v431 = vunpack.c.l.b16 %v415
    %v432 = vunpack.c.l.b16 %v416
    %v433 = vunpack.c.l.b16 %v417
    %v434 = vunpack.c.l.b16 %v418
    %v435 = vunpack.c.l.b16 %v419
    %v436 = vunpack.c.l.b16 %v420
    %v437 = vunpack.c.l.b16 %v421
    %v438 = vunpack.c.l.b16 %v422
    %v439 = vpack.c.b16 %v432, %v431
    %v440 = vpack.c.b16 %v434, %v433
    %v441 = vpack.c.b16 %v436, %v435
    %v442 = vpack.c.b16 %v438, %v437
    %447 = vmatprep.subr.bf16.mxu0 0
    %448 = vmatpush1.bf16.msra.mxu0 0
    %449 = vmatprep.subr.bf16.mxu0 0
    %450 = vmatpush1.bf16.msra.mxu0 0
    %451 = vmatprep.subr.bf16.mxu0 0
    %452 = vmatpush1.bf16.msra.mxu0 0
    %453 = vmatprep.subr.bf16.mxu0 0
    %454 = vmatpush1.bf16.msra.mxu0 0
    %455 = vmatprep.subr.bf16.mxu0 0
    %456 = vmatpush1.bf16.msra.mxu0 %v442
    %457 = vmatprep.subr.bf16.mxu0 0
    %458 = vmatpush1.bf16.msra.mxu0 %v441
    %459 = vmatprep.subr.bf16.mxu0 0
    %460 = vmatpush1.bf16.msra.mxu0 %v440
    %461 = vmatprep.subr.bf16.mxu0 0
    %462 = vmatpush1.bf16.msra.mxu0 %v439
    %463 = vmatprep.subr.bf16.mxu0 0
    %464 = vmatpush2.bf16.msra.mxu0 0
    %465 = vmatprep.subr.bf16.mxu0 0
    %466 = vmatpush2.bf16.msra.mxu0 0
    %467 = vmatprep.subr.bf16.mxu0 0
    %468 = vmatpush2.bf16.msra.mxu0 0
    %469 = vmatprep.subr.bf16.mxu0 0
    %470 = vmatpush2.bf16.msra.mxu0 0
    %471 = vmatprep.subr.bf16.mxu0 0
    %472 = vmatpush2.bf16.msra.mxu0 0
    %473 = vmatprep.subr.bf16.mxu0 0
    %474 = vmatpush2.bf16.msra.mxu0 0
    %475 = vmatprep.subr.bf16.mxu0 0
    %476 = vmatpush2.bf16.msra.mxu0 0
    %477 = vmatprep.subr.bf16.mxu0 0
    %478 = vmatpush2.bf16.msra.mxu0 0
    %479 = vmatprep.mubr.bf16.mxu0 0
    %480 = vmatmul.mubr.bf16.gmra.mxu0 %v143
    %v481 = vpop.f32.mrf.mxu0
    %v482 = vadd.f32 0.0, %v481
    %v483 = vpop.f32.mrf.mxu0
    %v484 = vpop.f32.mrf.mxu0
    %v485 = vadd.f32 0.0, %v484
    %v486 = vpop.f32.mrf.mxu0
    %487 = vdwg.mxu0
    %v488 = vmax.f32 %v412, %v482
    %v489 = vmax.f32 %v413, %v485
    %s490 = scalar_lea.vmem [#allocation5], 160
    %v491 = vld [vmem:[%s490] sm:$0xf]
    %v492 = vld [vmem:[%s490 + $0x4] sm:$0xf]
    %v493 = vld [vmem:[%s490 + $0x8] sm:$0xf]
    %v494 = vld [vmem:[%s490 + $0xc] sm:$0xf]
    %v495 = vld [vmem:[%s490 + $0x10] sm:$0xf]
    %v496 = vld [vmem:[%s490 + $0x14] sm:$0xf]
    %v497 = vld [vmem:[%s490 + $0x18] sm:$0xf]
    %v498 = vld [vmem:[%s490 + $0x1c] sm:$0xf]
    %v507 = vunpack.c.l.b16 %v491
    %v508 = vunpack.c.l.b16 %v492
    %v509 = vunpack.c.l.b16 %v493
    %v510 = vunpack.c.l.b16 %v494
    %v511 = vunpack.c.l.b16 %v495
    %v512 = vunpack.c.l.b16 %v496
    %v513 = vunpack.c.l.b16 %v497
    %v514 = vunpack.c.l.b16 %v498
    %v515 = vpack.c.b16 %v508, %v507
    %v516 = vpack.c.b16 %v510, %v509
    %v517 = vpack.c.b16 %v512, %v511
    %v518 = vpack.c.b16 %v514, %v513
    %523 = vmatprep.subr.bf16.mxu0 0
    %524 = vmatpush1.bf16.msra.mxu0 0
    %525 = vmatprep.subr.bf16.mxu0 0
    %526 = vmatpush1.bf16.msra.mxu0 0
    %527 = vmatprep.subr.bf16.mxu0 0
    %528 = vmatpush1.bf16.msra.mxu0 0
    %529 = vmatprep.subr.bf16.mxu0 0
    %530 = vmatpush1.bf16.msra.mxu0 0
    %531 = vmatprep.subr.bf16.mxu0 0
    %532 = vmatpush1.bf16.msra.mxu0 %v518
    %533 = vmatprep.subr.bf16.mxu0 0
    %534 = vmatpush1.bf16.msra.mxu0 %v517
    %535 = vmatprep.subr.bf16.mxu0 0
    %536 = vmatpush1.bf16.msra.mxu0 %v516
    %537 = vmatprep.subr.bf16.mxu0 0
    %538 = vmatpush1.bf16.msra.mxu0 %v515
    %539 = vmatprep.subr.bf16.mxu0 0
    %540 = vmatpush2.bf16.msra.mxu0 0
    %541 = vmatprep.subr.bf16.mxu0 0
    %542 = vmatpush2.bf16.msra.mxu0 0
    %543 = vmatprep.subr.bf16.mxu0 0
    %544 = vmatpush2.bf16.msra.mxu0 0
    %545 = vmatprep.subr.bf16.mxu0 0
    %546 = vmatpush2.bf16.msra.mxu0 0
    %547 = vmatprep.subr.bf16.mxu0 0
    %548 = vmatpush2.bf16.msra.mxu0 0
    %549 = vmatprep.subr.bf16.mxu0 0
    %550 = vmatpush2.bf16.msra.mxu0 0
    %551 = vmatprep.subr.bf16.mxu0 0
    %552 = vmatpush2.bf16.msra.mxu0 0
    %553 = vmatprep.subr.bf16.mxu0 0
    %554 = vmatpush2.bf16.msra.mxu0 0
    %555 = vmatprep.mubr.bf16.mxu0 0
    %556 = vmatmul.mubr.bf16.gmra.mxu0 %v143
    %v557 = vpop.f32.mrf.mxu0
    %v558 = vadd.f32 0.0, %v557
    %v559 = vpop.f32.mrf.mxu0
    %v560 = vpop.f32.mrf.mxu0
    %v561 = vadd.f32 0.0, %v560
    %v562 = vpop.f32.mrf.mxu0
    %563 = vdwg.mxu0
    %v564 = vmax.f32 %v488, %v558
    %v565 = vmax.f32 %v489, %v561
    %s566 = scalar_lea.vmem [#allocation5], 192
    %v567 = vld [vmem:[%s566] sm:$0xf]
    %v568 = vld [vmem:[%s566 + $0x4] sm:$0xf]
    %v569 = vld [vmem:[%s566 + $0x8] sm:$0xf]
    %v570 = vld [vmem:[%s566 + $0xc] sm:$0xf]
    %v571 = vld [vmem:[%s566 + $0x10] sm:$0xf]
    %v572 = vld [vmem:[%s566 + $0x14] sm:$0xf]
    %v573 = vld [vmem:[%s566 + $0x18] sm:$0xf]
    %v574 = vld [vmem:[%s566 + $0x1c] sm:$0xf]
    %v583 = vunpack.c.l.b16 %v567
    %v584 = vunpack.c.l.b16 %v568
    %v585 = vunpack.c.l.b16 %v569
    %v586 = vunpack.c.l.b16 %v570
    %v587 = vunpack.c.l.b16 %v571
    %v588 = vunpack.c.l.b16 %v572
    %v589 = vunpack.c.l.b16 %v573
    %v590 = vunpack.c.l.b16 %v574
    %v591 = vpack.c.b16 %v584, %v583
    %v592 = vpack.c.b16 %v586, %v585
    %v593 = vpack.c.b16 %v588, %v587
    %v594 = vpack.c.b16 %v590, %v589
    %599 = vmatprep.subr.bf16.mxu0 0
    %600 = vmatpush1.bf16.msra.mxu0 0
    %601 = vmatprep.subr.bf16.mxu0 0
    %602 = vmatpush1.bf16.msra.mxu0 0
    %603 = vmatprep.subr.bf16.mxu0 0
    %604 = vmatpush1.bf16.msra.mxu0 0
    %605 = vmatprep.subr.bf16.mxu0 0
    %606 = vmatpush1.bf16.msra.mxu0 0
    %607 = vmatprep.subr.bf16.mxu0 0
    %608 = vmatpush1.bf16.msra.mxu0 %v594
    %609 = vmatprep.subr.bf16.mxu0 0
    %610 = vmatpush1.bf16.msra.mxu0 %v593
    %611 = vmatprep.subr.bf16.mxu0 0
    %612 = vmatpush1.bf16.msra.mxu0 %v592
    %613 = vmatprep.subr.bf16.mxu0 0
    %614 = vmatpush1.bf16.msra.mxu0 %v591
    %615 = vmatprep.subr.bf16.mxu0 0
    %616 = vmatpush2.bf16.msra.mxu0 0
    %617 = vmatprep.subr.bf16.mxu0 0
    %618 = vmatpush2.bf16.msra.mxu0 0
    %619 = vmatprep.subr.bf16.mxu0 0
    %620 = vmatpush2.bf16.msra.mxu0 0
    %621 = vmatprep.subr.bf16.mxu0 0
    %622 = vmatpush2.bf16.msra.mxu0 0
    %623 = vmatprep.subr.bf16.mxu0 0
    %624 = vmatpush2.bf16.msra.mxu0 0
    %625 = vmatprep.subr.bf16.mxu0 0
    %626 = vmatpush2.bf16.msra.mxu0 0
    %627 = vmatprep.subr.bf16.mxu0 0
    %628 = vmatpush2.bf16.msra.mxu0 0
    %629 = vmatprep.subr.bf16.mxu0 0
    %630 = vmatpush2.bf16.msra.mxu0 0
    %631 = vmatprep.mubr.bf16.mxu0 0
    %632 = vmatmul.mubr.bf16.gmra.mxu0 %v143
    %v633 = vpop.f32.mrf.mxu0
    %v634 = vadd.f32 0.0, %v633
    %v635 = vpop.f32.mrf.mxu0
    %v636 = vpop.f32.mrf.mxu0
    %v637 = vadd.f32 0.0, %v636
    %v638 = vpop.f32.mrf.mxu0
    %639 = vdwg.mxu0
    %v640 = vmax.f32 %v564, %v634
    %v641 = vmax.f32 %v565, %v637
    %s642 = scalar_lea.vmem [#allocation5], 224
    %v643 = vld [vmem:[%s642] sm:$0xf]
    %v644 = vld [vmem:[%s642 + $0x4] sm:$0xf]
    %v645 = vld [vmem:[%s642 + $0x8] sm:$0xf]
    %v646 = vld [vmem:[%s642 + $0xc] sm:$0xf]
    %v647 = vld [vmem:[%s642 + $0x10] sm:$0xf]
    %v648 = vld [vmem:[%s642 + $0x14] sm:$0xf]
    %v649 = vld [vmem:[%s642 + $0x18] sm:$0xf]
    %v650 = vld [vmem:[%s642 + $0x1c] sm:$0xf]
    %v659 = vunpack.c.l.b16 %v643
    %v660 = vunpack.c.l.b16 %v644
    %v661 = vunpack.c.l.b16 %v645
    %v662 = vunpack.c.l.b16 %v646
    %v663 = vunpack.c.l.b16 %v647
    %v664 = vunpack.c.l.b16 %v648
    %v665 = vunpack.c.l.b16 %v649
    %v666 = vunpack.c.l.b16 %v650
    %v667 = vpack.c.b16 %v660, %v659
    %v668 = vpack.c.b16 %v662, %v661
    %v669 = vpack.c.b16 %v664, %v663
    %v670 = vpack.c.b16 %v666, %v665
    %675 = vmatprep.subr.bf16.mxu0 0
    %676 = vmatpush1.bf16.msra.mxu0 0
    %677 = vmatprep.subr.bf16.mxu0 0
    %678 = vmatpush1.bf16.msra.mxu0 0
    %679 = vmatprep.subr.bf16.mxu0 0
    %680 = vmatpush1.bf16.msra.mxu0 0
    %681 = vmatprep.subr.bf16.mxu0 0
    %682 = vmatpush1.bf16.msra.mxu0 0
    %683 = vmatprep.subr.bf16.mxu0 0
    %684 = vmatpush1.bf16.msra.mxu0 %v670
    %685 = vmatprep.subr.bf16.mxu0 0
    %686 = vmatpush1.bf16.msra.mxu0 %v669
    %687 = vmatprep.subr.bf16.mxu0 0
    %688 = vmatpush1.bf16.msra.mxu0 %v668
    %689 = vmatprep.subr.bf16.mxu0 0
    %690 = vmatpush1.bf16.msra.mxu0 %v667
    %691 = vmatprep.subr.bf16.mxu0 0
    %692 = vmatpush2.bf16.msra.mxu0 0
    %693 = vmatprep.subr.bf16.mxu0 0
    %694 = vmatpush2.bf16.msra.mxu0 0
    %695 = vmatprep.subr.bf16.mxu0 0
    %696 = vmatpush2.bf16.msra.mxu0 0
    %697 = vmatprep.subr.bf16.mxu0 0
    %698 = vmatpush2.bf16.msra.mxu0 0
    %699 = vmatprep.subr.bf16.mxu0 0
    %700 = vmatpush2.bf16.msra.mxu0 0
    %701 = vmatprep.subr.bf16.mxu0 0
    %702 = vmatpush2.bf16.msra.mxu0 0
    %703 = vmatprep.subr.bf16.mxu0 0
    %704 = vmatpush2.bf16.msra.mxu0 0
    %705 = vmatprep.subr.bf16.mxu0 0
    %706 = vmatpush2.bf16.msra.mxu0 0
    %707 = vmatprep.mubr.bf16.mxu0 0
    %708 = vmatmul.mubr.bf16.gmra.mxu0 %v143
    %v709 = vpop.f32.mrf.mxu0
    %v710 = vadd.f32 0.0, %v709
    %v711 = vpop.f32.mrf.mxu0
    %v712 = vpop.f32.mrf.mxu0
    %v713 = vadd.f32 0.0, %v712
    %v714 = vpop.f32.mrf.mxu0
    %715 = vdwg.mxu0
    %v716 = vmax.f32 %v640, %v710
    %v717 = vmax.f32 %v641, %v713
    %s718 = scalar_lea.vmem [#allocation5], 256
    %v719 = vld [vmem:[%s718] sm:$0xf]
    %v720 = vld [vmem:[%s718 + $0x4] sm:$0xf]
    %v721 = vld [vmem:[%s718 + $0x8] sm:$0xf]
    %v722 = vld [vmem:[%s718 + $0xc] sm:$0xf]
    %v723 = vld [vmem:[%s718 + $0x10] sm:$0xf]
    %v724 = vld [vmem:[%s718 + $0x14] sm:$0xf]
    %v725 = vld [vmem:[%s718 + $0x18] sm:$0xf]
    %v726 = vld [vmem:[%s718 + $0x1c] sm:$0xf]
    %v735 = vunpack.c.l.b16 %v719
    %v736 = vunpack.c.l.b16 %v720
    %v737 = vunpack.c.l.b16 %v721
    %v738 = vunpack.c.l.b16 %v722
    %v739 = vunpack.c.l.b16 %v723
    %v740 = vunpack.c.l.b16 %v724
    %v741 = vunpack.c.l.b16 %v725
    %v742 = vunpack.c.l.b16 %v726
    %v743 = vpack.c.b16 %v736, %v735
    %v744 = vpack.c.b16 %v738, %v737
    %v745 = vpack.c.b16 %v740, %v739
    %v746 = vpack.c.b16 %v742, %v741
    %751 = vmatprep.subr.bf16.mxu0 0
    %752 = vmatpush1.bf16.msra.mxu0 0
    %753 = vmatprep.subr.bf16.mxu0 0
    %754 = vmatpush1.bf16.msra.mxu0 0
    %755 = vmatprep.subr.bf16.mxu0 0
    %756 = vmatpush1.bf16.msra.mxu0 0
    %757 = vmatprep.subr.bf16.mxu0 0
    %758 = vmatpush1.bf16.msra.mxu0 0
    %759 = vmatprep.subr.bf16.mxu0 0
    %760 = vmatpush1.bf16.msra.mxu0 %v746
    %761 = vmatprep.subr.bf16.mxu0 0
    %762 = vmatpush1.bf16.msra.mxu0 %v745
    %763 = vmatprep.subr.bf16.mxu0 0
    %764 = vmatpush1.bf16.msra.mxu0 %v744
    %765 = vmatprep.subr.bf16.mxu0 0
    %766 = vmatpush1.bf16.msra.mxu0 %v743
    %767 = vmatprep.subr.bf16.mxu0 0
    %768 = vmatpush2.bf16.msra.mxu0 0
    %769 = vmatprep.subr.bf16.mxu0 0
    %770 = vmatpush2.bf16.msra.mxu0 0
    %771 = vmatprep.subr.bf16.mxu0 0
    %772 = vmatpush2.bf16.msra.mxu0 0
    %773 = vmatprep.subr.bf16.mxu0 0
    %774 = vmatpush2.bf16.msra.mxu0 0
    %775 = vmatprep.subr.bf16.mxu0 0
    %776 = vmatpush2.bf16.msra.mxu0 0
    %777 = vmatprep.subr.bf16.mxu0 0
    %778 = vmatpush2.bf16.msra.mxu0 0
    %779 = vmatprep.subr.bf16.mxu0 0
    %780 = vmatpush2.bf16.msra.mxu0 0
    %781 = vmatprep.subr.bf16.mxu0 0
    %782 = vmatpush2.bf16.msra.mxu0 0
    %783 = vmatprep.mubr.bf16.mxu0 0
    %784 = vmatmul.mubr.bf16.gmra.mxu0 %v143
    %v785 = vpop.f32.mrf.mxu0
    %v786 = vadd.f32 0.0, %v785
    %v787 = vpop.f32.mrf.mxu0
    %v788 = vpop.f32.mrf.mxu0
    %v789 = vadd.f32 0.0, %v788
    %v790 = vpop.f32.mrf.mxu0
    %791 = vdwg.mxu0
    %v792 = vmax.f32 %v716, %v786
    %v793 = vmax.f32 %v717, %v789
    %s794 = scalar_lea.vmem [#allocation5], 288
    %v795 = vld [vmem:[%s794] sm:$0xf]
    %v796 = vld [vmem:[%s794 + $0x4] sm:$0xf]
    %v797 = vld [vmem:[%s794 + $0x8] sm:$0xf]
    %v798 = vld [vmem:[%s794 + $0xc] sm:$0xf]
    %v799 = vld [vmem:[%s794 + $0x10] sm:$0xf]
    %v800 = vld [vmem:[%s794 + $0x14] sm:$0xf]
    %v801 = vld [vmem:[%s794 + $0x18] sm:$0xf]
    %v802 = vld [vmem:[%s794 + $0x1c] sm:$0xf]
    %v811 = vunpack.c.l.b16 %v795
    %v812 = vunpack.c.l.b16 %v796
    %v813 = vunpack.c.l.b16 %v797
    %v814 = vunpack.c.l.b16 %v798
    %v815 = vunpack.c.l.b16 %v799
    %v816 = vunpack.c.l.b16 %v800
    %v817 = vunpack.c.l.b16 %v801
    %v818 = vunpack.c.l.b16 %v802
    %v819 = vpack.c.b16 %v812, %v811
    %v820 = vpack.c.b16 %v814, %v813
    %v821 = vpack.c.b16 %v816, %v815
    %v822 = vpack.c.b16 %v818, %v817
    %827 = vmatprep.subr.bf16.mxu0 0
    %828 = vmatpush1.bf16.msra.mxu0 0
    %829 = vmatprep.subr.bf16.mxu0 0
    %830 = vmatpush1.bf16.msra.mxu0 0
    %831 = vmatprep.subr.bf16.mxu0 0
    %832 = vmatpush1.bf16.msra.mxu0 0
    %833 = vmatprep.subr.bf16.mxu0 0
    %834 = vmatpush1.bf16.msra.mxu0 0
    %835 = vmatprep.subr.bf16.mxu0 0
    %836 = vmatpush1.bf16.msra.mxu0 %v822
    %837 = vmatprep.subr.bf16.mxu0 0
    %838 = vmatpush1.bf16.msra.mxu0 %v821
    %839 = vmatprep.subr.bf16.mxu0 0
    %840 = vmatpush1.bf16.msra.mxu0 %v820
    %841 = vmatprep.subr.bf16.mxu0 0
    %842 = vmatpush1.bf16.msra.mxu0 %v819
    %843 = vmatprep.subr.bf16.mxu0 0
    %844 = vmatpush2.bf16.msra.mxu0 0
    %845 = vmatprep.subr.bf16.mxu0 0
    %846 = vmatpush2.bf16.msra.mxu0 0
    %847 = vmatprep.subr.bf16.mxu0 0
    %848 = vmatpush2.bf16.msra.mxu0 0
    %849 = vmatprep.subr.bf16.mxu0 0
    %850 = vmatpush2.bf16.msra.mxu0 0
    %851 = vmatprep.subr.bf16.mxu0 0
    %852 = vmatpush2.bf16.msra.mxu0 0
    %853 = vmatprep.subr.bf16.mxu0 0
    %854 = vmatpush2.bf16.msra.mxu0 0
    %855 = vmatprep.subr.bf16.mxu0 0
    %856 = vmatpush2.bf16.msra.mxu0 0
    %857 = vmatprep.subr.bf16.mxu0 0
    %858 = vmatpush2.bf16.msra.mxu0 0
    %859 = vmatprep.mubr.bf16.mxu0 0
    %860 = vmatmul.mubr.bf16.gmra.mxu0 %v143
    %v861 = vpop.f32.mrf.mxu0
    %v862 = vadd.f32 0.0, %v861
    %v863 = vpop.f32.mrf.mxu0
    %v864 = vpop.f32.mrf.mxu0
    %v865 = vadd.f32 0.0, %v864
    %v866 = vpop.f32.mrf.mxu0
    %867 = vdwg.mxu0
    %v868 = vmax.f32 %v792, %v862
    %v869 = vmax.f32 %v793, %v865
    %s870 = scalar_lea.vmem [#allocation5], 320
    %v871 = vld [vmem:[%s870] sm:$0xf]
    %v872 = vld [vmem:[%s870 + $0x4] sm:$0xf]
    %v873 = vld [vmem:[%s870 + $0x8] sm:$0xf]
    %v874 = vld [vmem:[%s870 + $0xc] sm:$0xf]
    %v875 = vld [vmem:[%s870 + $0x10] sm:$0xf]
    %v876 = vld [vmem:[%s870 + $0x14] sm:$0xf]
    %v877 = vld [vmem:[%s870 + $0x18] sm:$0xf]
    %v878 = vld [vmem:[%s870 + $0x1c] sm:$0xf]
    %v887 = vunpack.c.l.b16 %v871
    %v888 = vunpack.c.l.b16 %v872
    %v889 = vunpack.c.l.b16 %v873
    %v890 = vunpack.c.l.b16 %v874
    %v891 = vunpack.c.l.b16 %v875
    %v892 = vunpack.c.l.b16 %v876
    %v893 = vunpack.c.l.b16 %v877
    %v894 = vunpack.c.l.b16 %v878
    %v895 = vpack.c.b16 %v888, %v887
    %v896 = vpack.c.b16 %v890, %v889
    %v897 = vpack.c.b16 %v892, %v891
    %v898 = vpack.c.b16 %v894, %v893
    %903 = vmatprep.subr.bf16.mxu0 0
    %904 = vmatpush1.bf16.msra.mxu0 0
    %905 = vmatprep.subr.bf16.mxu0 0
    %906 = vmatpush1.bf16.msra.mxu0 0
    %907 = vmatprep.subr.bf16.mxu0 0
    %908 = vmatpush1.bf16.msra.mxu0 0
    %909 = vmatprep.subr.bf16.mxu0 0
    %910 = vmatpush1.bf16.msra.mxu0 0
    %911 = vmatprep.subr.bf16.mxu0 0
    %912 = vmatpush1.bf16.msra.mxu0 %v898
    %913 = vmatprep.subr.bf16.mxu0 0
    %914 = vmatpush1.bf16.msra.mxu0 %v897
    %915 = vmatprep.subr.bf16.mxu0 0
    %916 = vmatpush1.bf16.msra.mxu0 %v896
    %917 = vmatprep.subr.bf16.mxu0 0
    %918 = vmatpush1.bf16.msra.mxu0 %v895
    %919 = vmatprep.subr.bf16.mxu0 0
    %920 = vmatpush2.bf16.msra.mxu0 0
    %921 = vmatprep.subr.bf16.mxu0 0
    %922 = vmatpush2.bf16.msra.mxu0 0
    %923 = vmatprep.subr.bf16.mxu0 0
    %924 = vmatpush2.bf16.msra.mxu0 0
    %925 = vmatprep.subr.bf16.mxu0 0
    %926 = vmatpush2.bf16.msra.mxu0 0
    %927 = vmatprep.subr.bf16.mxu0 0
    %928 = vmatpush2.bf16.msra.mxu0 0
    %929 = vmatprep.subr.bf16.mxu0 0
    %930 = vmatpush2.bf16.msra.mxu0 0
    %931 = vmatprep.subr.bf16.mxu0 0
    %932 = vmatpush2.bf16.msra.mxu0 0
    %933 = vmatprep.subr.bf16.mxu0 0
    %934 = vmatpush2.bf16.msra.mxu0 0
    %935 = vmatprep.mubr.bf16.mxu0 0
    %936 = vmatmul.mubr.bf16.gmra.mxu0 %v143
    %v937 = vpop.f32.mrf.mxu0
    %v938 = vadd.f32 0.0, %v937
    %v939 = vpop.f32.mrf.mxu0
    %v940 = vpop.f32.mrf.mxu0
    %v941 = vadd.f32 0.0, %v940
    %v942 = vpop.f32.mrf.mxu0
    %943 = vdwg.mxu0
    %v944 = vmax.f32 %v868, %v938
    %v945 = vmax.f32 %v869, %v941
    %s946 = scalar_lea.vmem [#allocation5], 352
    %v947 = vld [vmem:[%s946] sm:$0xf]
    %v948 = vld [vmem:[%s946 + $0x4] sm:$0xf]
    %v949 = vld [vmem:[%s946 + $0x8] sm:$0xf]
    %v950 = vld [vmem:[%s946 + $0xc] sm:$0xf]
    %v951 = vld [vmem:[%s946 + $0x10] sm:$0xf]
    %v952 = vld [vmem:[%s946 + $0x14] sm:$0xf]
    %v953 = vld [vmem:[%s946 + $0x18] sm:$0xf]
    %v954 = vld [vmem:[%s946 + $0x1c] sm:$0xf]
    %v963 = vunpack.c.l.b16 %v947
    %v964 = vunpack.c.l.b16 %v948
    %v965 = vunpack.c.l.b16 %v949
    %v966 = vunpack.c.l.b16 %v950
    %v967 = vunpack.c.l.b16 %v951
    %v968 = vunpack.c.l.b16 %v952
    %v969 = vunpack.c.l.b16 %v953
    %v970 = vunpack.c.l.b16 %v954
    %v971 = vpack.c.b16 %v964, %v963
    %v972 = vpack.c.b16 %v966, %v965
    %v973 = vpack.c.b16 %v968, %v967
    %v974 = vpack.c.b16 %v970, %v969
    %979 = vmatprep.subr.bf16.mxu0 0
    %980 = vmatpush1.bf16.msra.mxu0 0
    %981 = vmatprep.subr.bf16.mxu0 0
    %982 = vmatpush1.bf16.msra.mxu0 0
    %983 = vmatprep.subr.bf16.mxu0 0
    %984 = vmatpush1.bf16.msra.mxu0 0
    %985 = vmatprep.subr.bf16.mxu0 0
    %986 = vmatpush1.bf16.msra.mxu0 0
    %987 = vmatprep.subr.bf16.mxu0 0
    %988 = vmatpush1.bf16.msra.mxu0 %v974
    %989 = vmatprep.subr.bf16.mxu0 0
    %990 = vmatpush1.bf16.msra.mxu0 %v973
    %991 = vmatprep.subr.bf16.mxu0 0
    %992 = vmatpush1.bf16.msra.mxu0 %v972
    %993 = vmatprep.subr.bf16.mxu0 0
    %994 = vmatpush1.bf16.msra.mxu0 %v971
    %995 = vmatprep.subr.bf16.mxu0 0
    %996 = vmatpush2.bf16.msra.mxu0 0
    %997 = vmatprep.subr.bf16.mxu0 0
    %998 = vmatpush2.bf16.msra.mxu0 0
    %999 = vmatprep.subr.bf16.mxu0 0
    %1000 = vmatpush2.bf16.msra.mxu0 0
    %1001 = vmatprep.subr.bf16.mxu0 0
    %1002 = vmatpush2.bf16.msra.mxu0 0
    %1003 = vmatprep.subr.bf16.mxu0 0
    %1004 = vmatpush2.bf16.msra.mxu0 0
    %1005 = vmatprep.subr.bf16.mxu0 0
    %1006 = vmatpush2.bf16.msra.mxu0 0
    %1007 = vmatprep.subr.bf16.mxu0 0
    %1008 = vmatpush2.bf16.msra.mxu0 0
    %1009 = vmatprep.subr.bf16.mxu0 0
    %1010 = vmatpush2.bf16.msra.mxu0 0
    %1011 = vmatprep.mubr.bf16.mxu0 0
    %1012 = vmatmul.mubr.bf16.gmra.mxu0 %v143
    %v1013 = vpop.f32.mrf.mxu0
    %v1014 = vadd.f32 0.0, %v1013
    %v1015 = vpop.f32.mrf.mxu0
    %v1016 = vpop.f32.mrf.mxu0
    %v1017 = vadd.f32 0.0, %v1016
    %v1018 = vpop.f32.mrf.mxu0
    %1019 = vdwg.mxu0
    %v1020 = vmax.f32 %v944, %v1014
    %v1021 = vmax.f32 %v945, %v1017
    %v1022 = vld [vmem:[%s2] sm:$0x1]
    %v1024 = vlaneseq
    %v1025 = vshrl.u32 %v1024, 7
    %v1026 = vsub.s32 0, %v1025
    %v1027 = vrot.slane %v1022, %v1026
    %v1029 = vadd.f32 %v1020, %v1027
    %v1030 = vadd.f32 %v1021, %v1027
    %v1031 = vmax.f32 %v1029, 0.0
    %v1032 = vmax.f32 %v1030, 0.0
    %v1033 = vpack.c.bf16 %v1032, %v1031
    %v1035 = vcombine.high %v1033, %v1033
    %v1037 = vunpack.c.l.s4 1966171168
    %v1038 = vunpack.c.0.s8 %v1037
    %v1039 = vlaneseq
    %v1040 = vshrl.u32 %v1039, 7
    %v1041 = vsub.s32 %v1038, %v1040
    %v1042 = vrot.slane %v1033, %v1041
    %v1044 = vunpack.c.l.s4 1966171168
    %v1045 = vunpack.c.0.s8 %v1044
    %v1046 = vlaneseq
    %v1047 = vshrl.u32 %v1046, 7
    %v1048 = vsub.s32 %v1045, %v1047
    %v1049 = vrot.slane %v1035, %v1048
    %v1050 = vcombine.high %v1042, %v1042
    %v1051 = vcombine.high %v1049, %v1049
    %v1053 = vunpack.c.l.s4 1966171168
    %v1054 = vunpack.c.0.s8 %v1053
    %v1055 = vlaneseq
    %v1056 = vshrl.u32 %v1055, 7
    %v1057 = vsub.s32 %v1054, %v1056
    %v1058 = vrot.slane %v1042, %v1057
    %v1060 = vunpack.c.l.s4 1966171168
    %v1061 = vunpack.c.0.s8 %v1060
    %v1062 = vlaneseq
    %v1063 = vshrl.u32 %v1062, 7
    %v1064 = vsub.s32 %v1061, %v1063
    %v1065 = vrot.slane %v1049, %v1064
    %v1067 = vunpack.c.l.s4 1966171168
    %v1068 = vunpack.c.0.s8 %v1067
    %v1069 = vlaneseq
    %v1070 = vshrl.u32 %v1069, 7
    %v1071 = vsub.s32 %v1068, %v1070
    %v1072 = vrot.slane %v1050, %v1071
    %v1074 = vunpack.c.l.s4 1966171168
    %v1075 = vunpack.c.0.s8 %v1074
    %v1076 = vlaneseq
    %v1077 = vshrl.u32 %v1076, 7
    %v1078 = vsub.s32 %v1075, %v1077
    %v1079 = vrot.slane %v1051, %v1078
    %v1080 = vcombine.high %v1058, %v1058
    %v1081 = vcombine.high %v1065, %v1065
    %v1082 = vcombine.high %v1072, %v1072
    %v1083 = vcombine.high %v1079, %v1079
    %1092 = vst [vmem:[#allocation7] sm:$0x1] %v1058
    %1093 = vst [vmem:[#allocation7 + $0x1] sm:$0x1] %v1072
    %1094 = vst [vmem:[#allocation7 + $0x2] sm:$0x1] %v1080
    %1095 = vst [vmem:[#allocation7 + $0x3] sm:$0x1] %v1082
    %1096 = vst [vmem:[#allocation7 + $0x4] sm:$0x1] %v1065
    %1097 = vst [vmem:[#allocation7 + $0x5] sm:$0x1] %v1079
    %1098 = vst [vmem:[#allocation7 + $0x6] sm:$0x1] %v1081
    %1099 = vst [vmem:[#allocation7 + $0x7] sm:$0x1] %v1083
    // Predicated region
    $region22: #{tpu_custom_call.1} parent=1 // pred_check
      _
    $region23: #{tpu_custom_call.1} parent=1 // pred_check_branch
      %1101 = sbr.rel (0) target = $region25
    $region24: #{tpu_custom_call.1} parent=1 // pred_region
      %s1103 = ssub.s32 128, 16
      %1104 = vsyncadd [#allocation4], %s1103
      %s1105 = sshll.u32 [#allocation7], 4
      %s1106 = int_to_ptr.vmem [resolvable:$true] %s1105
      %1111 = dma.vmem_to_hbm [thread:$0]  %s1106, 16, %s3, [#allocation4], 16, 16, 1
    $region25: #{tpu_custom_call.1} parent=1 // pred_fallthru
      _
    // Predicated region
    $region26: #{tpu_custom_call.1} parent=1 // pred_check
      _
    $region27: #{tpu_custom_call.1} parent=1 // pred_check_branch
      %1113 = sbr.rel (0) target = $region29
    $region28: #{tpu_custom_call.1} parent=1 // pred_region
      %1114 = dma.done [#allocation4], 128
    $region29: #{tpu_custom_call.1} parent=1 // pred_fallthru
      _
    %1115 = vsyncpa [#allocation3], 1
    %1116 = vsyncpa [#allocation6], 1
    %1117 = vsyncpa [#allocation4], 1

</llo_original>
